<compile_context>
chip_gen: v6e
topology: v6e:2x2x1
jax: 0.10.0
libtpu: 0.0.40
codegen_flags: <defaults>
</compile_context>

<pallas_src>
import functools

import jax
import jax.numpy as jnp
from jax import lax
from jax.experimental import pallas as pl
from jax.experimental.pallas import tpu as pltpu

MiB = 1024 * 1024


def lstm_chunk_kernel(x_ref, w_ih_ref, w_hh_ref, b_ref, h_out_ref,
                      gx_scr, h_scr, c_scr, *, unroll):
    """One (batch_block, seq_chunk) tile of the LSTM.

    x_ref:     (Tc, Bb, E)   token embeddings (time-major), matmul dtype
    w_ih_ref:  (E, 4H)       input weights, pre-transposed; i/f/o cols *0.5
    w_hh_ref:  (H, 4H)       recurrent weights, pre-transposed; i/f/o cols *0.5
    b_ref:     (1, 4H) f32   b_ih + b_hh, i/f/o entries *0.5
    h_out_ref: (Tc, Bb, H) f32  hidden states for this tile (lane-dense)
    gx_scr:    (Tc*Bb, 4H) f32  per-chunk input projection scratch
    h_scr/c_scr: (Bb, H) f32    recurrent state carried across seq chunks
    """
    t_chunk, bb, edim = x_ref.shape
    hdim = w_hh_ref.shape[0]

    # New batch block => fresh (h, c).  The seq axis is the last grid axis,
    # so it restarts at 0 exactly when a new batch block begins.
    @pl.when(pl.program_id(1) == 0)
    def _():
        h_scr[...] = jnp.zeros_like(h_scr)
        c_scr[...] = jnp.zeros_like(c_scr)

    w_ih = w_ih_ref[...]
    w_hh = w_hh_ref[...]
    mm_dtype = w_hh.dtype
    bias = b_ref[...]                                           # (1, 4H) f32

    # Time-parallel input projection for the whole chunk: one fat-M MXU matmul
    # with the bias folded in once.  The (Tc, Bb) collapse is layout-preserving
    # (Bb is a multiple of 8, lane dim untouched), so no relayout cost.
    x_flat = x_ref[...].reshape(t_chunk * bb, edim)
    gx_scr[...] = (jnp.dot(x_flat, w_ih, preferred_element_type=jnp.float32)
                   + bias)

    # TODO(synk): keep W_hh staged in MXU weight registers across timesteps via
    # pltpu.matmul_push_rhs / matmul_acc_lhs / matmul_pop (needs per-generation
    # splitting of the (H, 4H) RHS into MXU-sized tiles).

    def step(t, carry):
        h, c = carry
        row = pl.multiple_of(t * bb, bb)
        # Only the serial recurrent matmul stays on the per-step chain.
        gates = gx_scr[pl.ds(row, bb), :] + jnp.dot(
            h.astype(mm_dtype), w_hh, preferred_element_type=jnp.float32)
        # One EUP pass for all four gates; i/f/o were pre-scaled by 0.5 so
        # sigmoid(x) == 0.5*tanh(x/2)+0.5 exactly.  The affine fixup rides on
        # otherwise-idle VPU slots.
        tg = jnp.tanh(gates)
        i_g = 0.5 * tg[:, 0 * hdim:1 * hdim] + 0.5
        f_g = 0.5 * tg[:, 1 * hdim:2 * hdim] + 0.5
        g_g = tg[:, 2 * hdim:3 * hdim]
        o_g = 0.5 * tg[:, 3 * hdim:4 * hdim] + 0.5
        c_new = f_g * c + i_g * g_g
        h_new = o_g * jnp.tanh(c_new)
        h_out_ref[t] = h_new
        return (h_new, c_new)

    h_fin, c_fin = lax.fori_loop(0, t_chunk, step, (h_scr[...], c_scr[...]),
                                 unroll=unroll)
    h_scr[...] = h_fin
    c_scr[...] = c_fin


def baseline_tagger_forward(inputs, params, *, seq_chunk=64, batch_block=None,
                            matmul_dtype=jnp.bfloat16):
    """inputs: (batch, seq) int32 token ids.  Returns (batch, seq, tags) f32."""
    emb_table = params["embeddings"]                      # (vocab, E)
    w_ih = params["w_ih"]                                 # (4H, E)
    w_hh = params["w_hh"]                                 # (4H, H)
    b_ih = params["b_ih"]                                 # (4H,)
    b_hh = params["b_hh"]                                 # (4H,)
    w_out = params["w_out"]                               # (T, H)
    b_out = params["b_out"]                               # (T,)

    batch, seq = inputs.shape
    emb_dim = emb_table.shape[1]
    hdim = w_hh.shape[1]
    tags = w_out.shape[0]
    assert hdim % 128 == 0, "gate slices must be lane-aligned (H % 128 == 0)"
    hi_prec = jax.lax.Precision.HIGHEST

    # sigmoid(x) = 0.5*tanh(x/2) + 0.5  =>  pre-scale the i/f/o gate rows of
    # the weights/bias by 0.5 so the kernel runs a single tanh over all 4H gate
    # columns per step (one EUP pass) and fixes i/f/o up with a VPU affine.
    gate_scale = jnp.concatenate([
        jnp.full((2 * hdim,), 0.5, jnp.float32),          # i, f
        jnp.ones((hdim,), jnp.float32),                   # g (true tanh gate)
        jnp.full((hdim,), 0.5, jnp.float32),              # o
    ])
    w_ih_t = (w_ih * gate_scale[:, None]).T.astype(matmul_dtype)      # (E, 4H)
    w_hh_t = (w_hh * gate_scale[:, None]).T.astype(matmul_dtype)      # (H, 4H)
    bias = ((b_ih + b_hh).astype(jnp.float32) * gate_scale)[None, :]  # (1, 4H)

    # Glue: embedding gather, produced directly time-major (no activation
    # transpose pass).  Cast once to the matmul dtype (halves DMA for bf16).
    x_tm = jnp.take(emb_table, inputs.T, axis=0).astype(matmul_dtype)  # (S,B,E)

    # --- tiling --------------------------------------------------------------
    # One fat batch block by default (maximizes MXU M per serial step); pass an
    # explicit batch_block ~= ceil(batch/2) on v7x to split across both TCs.
    if batch_block is None:
        bb = min(pl.cdiv(batch, 8) * 8, 128)
    else:
        bb = pl.cdiv(batch_block, 8) * 8
    batch_p = pl.cdiv(batch, bb) * bb
    sc = max(1, min(seq_chunk, seq))

    mm_b = jnp.dtype(matmul_dtype).itemsize
    f32b = 4

    def tile_vmem(sc_):
        return (2 * sc_ * bb * emb_dim * mm_b              # x tile (2x buffered)
                + 2 * sc_ * bb * hdim * f32b                # h_out tile (2x buffered)
                + 2 * (emb_dim + hdim) * 4 * hdim * mm_b    # weights (2x buffered)
                + 2 * 8 * 4 * hdim * f32b                   # bias (sublane-padded)
                + sc_ * bb * 4 * hdim * f32b                # gx scratch
                + 2 * bb * hdim * f32b)                     # h/c carry

    try:
        vmem_cap = pltpu.get_tpu_info().vmem_capacity_bytes
    except Exception:
        vmem_cap = 64 * MiB                                 # conservative (v7x)
    vmem_budget = (vmem_cap * 3) // 4                       # pipeliner headroom
    while sc > 8 and tile_vmem(sc) > vmem_budget:
        sc = max(8, sc // 2)
    vmem_limit = int(min(max(tile_vmem(sc) * 5 // 4, 32 * MiB), vmem_budget))

    seq_p = pl.cdiv(seq, sc) * sc
    if seq_p != seq or batch_p != batch:
        # Padded rows/timesteps are sliced off below; the carry only flows
        # forward in time, so padding never contaminates real outputs.
        x_tm = jnp.pad(x_tm, ((0, seq_p - seq), (0, batch_p - batch), (0, 0)))

    grid = (batch_p // bb, seq_p // sc)
    unroll = True if sc <= 16 else 8

    h_all = pl.pallas_call(
        functools.partial(lstm_chunk_kernel, unroll=unroll),
        out_shape=jax.ShapeDtypeStruct((seq_p, batch_p, hdim), jnp.float32),
        grid_spec=pltpu.PrefetchScalarGridSpec(
            num_scalar_prefetch=0,
            grid=grid,
            in_specs=[
                pl.BlockSpec((sc, bb, emb_dim), lambda b, s: (s, b, 0)),
                pl.BlockSpec((emb_dim, 4 * hdim), lambda b, s: (0, 0)),
                pl.BlockSpec((hdim, 4 * hdim), lambda b, s: (0, 0)),
                pl.BlockSpec((1, 4 * hdim), lambda b, s: (0, 0)),
            ],
            out_specs=pl.BlockSpec((sc, bb, hdim), lambda b, s: (s, b, 0)),
            scratch_shapes=[
                pltpu.VMEM((sc * bb, 4 * hdim), jnp.float32),   # gx chunk
                pltpu.VMEM((bb, hdim), jnp.float32),            # h carry
                pltpu.VMEM((bb, hdim), jnp.float32),            # c carry
            ]),
        compiler_params=pltpu.CompilerParams(
            dimension_semantics=("parallel", "arbitrary"),
            vmem_limit_bytes=vmem_limit),
    )(x_tm, w_ih_t, w_hh_t, bias)

    hid = h_all[:seq, :batch, :]                          # (S, B, H) f32

    # Deferred output head: one matmul for all timesteps (the tiny tag dim
    # never touches the kernel's lane-dense store path).
    logits = jnp.dot(hid.reshape(seq * batch, hdim).astype(matmul_dtype),
                     w_out.T.astype(matmul_dtype),
                     preferred_element_type=jnp.float32, precision=hi_prec)
    logits = logits + b_out.astype(jnp.float32)[None, :]
    return logits.reshape(seq, batch, tags).transpose(1, 0, 2)   # (B, S, T)


def reference_forward(inputs, params):
    """Pure-JAX reference with identical semantics (sanity check)."""
    hi_prec = jax.lax.Precision.HIGHEST
    dot = functools.partial(jnp.dot, precision=hi_prec)
    emb = jnp.take(params["embeddings"], inputs, axis=0)  # (B, S, E)
    hdim = params["w_hh"].shape[1]
    batch = inputs.shape[0]
    w_ih_t = params["w_ih"].T
    w_hh_t = params["w_hh"].T
    b = params["b_ih"] + params["b_hh"]

    def step(carry, x_t):
        h, c = carry
        gates = dot(x_t, w_ih_t) + dot(h, w_hh_t) + b
        i = jax.nn.sigmoid(gates[:, 0 * hdim:1 * hdim])
        f = jax.nn.sigmoid(gates[:, 1 * hdim:2 * hdim])
        g = jnp.tanh(gates[:, 2 * hdim:3 * hdim])
        o = jax.nn.sigmoid(gates[:, 3 * hdim:4 * hdim])
        c = f * c + i * g
        h = o * jnp.tanh(c)
        return (h, c), h

    h0 = jnp.zeros((batch, hdim), jnp.float32)
    c0 = jnp.zeros((batch, hdim), jnp.float32)
    _, hs = lax.scan(step, (h0, c0), jnp.transpose(emb, (1, 0, 2)))
    hid = jnp.transpose(hs, (1, 0, 2))                    # (B, S, H)
    return dot(hid, params["w_out"].T) + params["b_out"]


if __name__ == "__main__":
    # Small, deterministic config; chosen so both the multi-tile grid and the
    # default fat-block path are exercised.
    vocab, emb_dim = 20, 32
    rnn_dim, tags_count = 128, 2
    batch, seq = 10, 24

    key = jax.random.PRNGKey(0)
    ks = jax.random.split(key, 8)
    params = {
        "embeddings": jax.random.normal(ks[0], (vocab, emb_dim), jnp.float32),
        "w_ih": jax.random.normal(ks[1], (4 * rnn_dim, emb_dim), jnp.float32) * 0.1,
        "w_hh": jax.random.normal(ks[2], (4 * rnn_dim, rnn_dim), jnp.float32) * 0.05,
        "b_ih": jax.random.normal(ks[3], (4 * rnn_dim,), jnp.float32) * 0.1,
        "b_hh": jax.random.normal(ks[4], (4 * rnn_dim,), jnp.float32) * 0.1,
        "w_out": jax.random.normal(ks[5], (tags_count, rnn_dim), jnp.float32) * 0.1,
        "b_out": jax.random.normal(ks[6], (tags_count,), jnp.float32) * 0.1,
    }
    inputs = jax.random.randint(ks[7], (batch, seq), 0, vocab, dtype=jnp.int32)

    ref = jax.block_until_ready(reference_forward(inputs, params))

    # f32 matmul operands; small tiles so the (batch_blocks, seq_chunks) grid
    # is (2, 3) and the carry-across-chunks / reset logic is exercised.
    fwd_f32 = jax.jit(functools.partial(
        baseline_tagger_forward, params=params, seq_chunk=8, batch_block=8,
        matmul_dtype=jnp.float32))
    out_f32 = jax.block_until_ready(fwd_f32(inputs))
    assert out_f32.shape == (batch, seq, tags_count)
    assert jnp.allclose(out_f32, ref, atol=1e-3, rtol=1e-3), \
        float(jnp.max(jnp.abs(out_f32 - ref)))

    # Default path: bf16 matmul operands (f32 accumulation / f32 gate math),
    # one fat batch block, single seq chunk.
    fwd_bf16 = jax.jit(functools.partial(
        baseline_tagger_forward, params=params, matmul_dtype=jnp.bfloat16))
    out_bf16 = jax.block_until_ready(fwd_bf16(inputs))
    assert out_bf16.shape == (batch, seq, tags_count)
    assert jnp.allclose(out_bf16, ref, atol=5e-2, rtol=5e-2), \
        float(jnp.max(jnp.abs(out_bf16 - ref)))

    print("KERNEL_OK")
</pallas_src>

<mosaic_0001>
module attributes {stable_mosaic.version = 11 : i64} {
  func.func @lstm_chunk_kernel(%arg0: i32, %arg1: i32, %arg2: memref<8x8x32xf32, #tpu.memory_space<vmem>>, %arg3: memref<32x512xf32, #tpu.memory_space<vmem>>, %arg4: memref<128x512xf32, #tpu.memory_space<vmem>>, %arg5: memref<1x512xf32, #tpu.memory_space<vmem>>, %arg6: memref<8x8x128xf32, #tpu.memory_space<vmem>>, %arg7: memref<64x512xf32, #tpu.memory_space<vmem>>, %arg8: memref<8x128xf32, #tpu.memory_space<vmem>>, %arg9: memref<8x128xf32, #tpu.memory_space<vmem>>) attributes {dimension_semantics = [#tpu.dimension_semantics<parallel>, #tpu.dimension_semantics<arbitrary>], iteration_bounds = array<i64: 2, 3>, scalar_prefetch = 0 : i64, scratch_operands = 3 : i64, tpu.core_type = #tpu.core_type<tc>, window_params = [{transform_indices = @transform_0, window_bounds = array<i64: 8, 8, 32>}, {pipeline_mode = #tpu.pipeline_mode<synchronous>, transform_indices = @transform_1, window_bounds = array<i64: 32, 512>}, {pipeline_mode = #tpu.pipeline_mode<synchronous>, transform_indices = @transform_2, window_bounds = array<i64: 128, 512>}, {pipeline_mode = #tpu.pipeline_mode<synchronous>, transform_indices = @transform_3, window_bounds = array<i64: 1, 512>}, {transform_indices = @transform_4, window_bounds = array<i64: 8, 8, 128>}]} {
    %c0_i32 = arith.constant 0 : i32
    %0 = arith.cmpi eq, %arg1, %c0_i32 : i32
    %1 = arith.extui %0 : i1 to i32
    %c0_i32_0 = arith.constant 0 : i32
    %2 = arith.cmpi ne, %1, %c0_i32_0 : i32
    scf.if %2 {
      %cst_108 = arith.constant 0.000000e+00 : f32
      %272 = vector.broadcast %cst_108 : f32 to vector<8x128xf32>
      %c0_109 = arith.constant 0 : index
      %c0_110 = arith.constant 0 : index
      %273 = vector.load %arg8[%c0_109, %c0_110] : memref<8x128xf32, #tpu.memory_space<vmem>>, vector<8x128xf32>
      tpu.vector_store %arg8[%c0_109, %c0_110], %272 {strides = array<i32>} : memref<8x128xf32, #tpu.memory_space<vmem>>, vector<8x128xf32>,
      %cst_111 = arith.constant 0.000000e+00 : f32
      %274 = vector.broadcast %cst_111 : f32 to vector<8x128xf32>
      %c0_112 = arith.constant 0 : index
      %c0_113 = arith.constant 0 : index
      %275 = vector.load %arg9[%c0_112, %c0_113] : memref<8x128xf32, #tpu.memory_space<vmem>>, vector<8x128xf32>
      tpu.vector_store %arg9[%c0_112, %c0_113], %274 {strides = array<i32>} : memref<8x128xf32, #tpu.memory_space<vmem>>, vector<8x128xf32>,
    } else {
    }
    %c0 = arith.constant 0 : index
    %c0_1 = arith.constant 0 : index
    %3 = vector.load %arg3[%c0, %c0_1] : memref<32x512xf32, #tpu.memory_space<vmem>>, vector<32x512xf32>
    %c0_2 = arith.constant 0 : index
    %c0_3 = arith.constant 0 : index
    %4 = vector.load %arg4[%c0_2, %c0_3] : memref<128x512xf32, #tpu.memory_space<vmem>>, vector<128x512xf32>
    %c0_4 = arith.constant 0 : index
    %c0_5 = arith.constant 0 : index
    %5 = vector.load %arg5[%c0_4, %c0_5] : memref<1x512xf32, #tpu.memory_space<vmem>>, vector<1x512xf32>
    %c0_6 = arith.constant 0 : index
    %c0_7 = arith.constant 0 : index
    %c0_8 = arith.constant 0 : index
    %6 = vector.load %arg2[%c0_6, %c0_7, %c0_8] : memref<8x8x32xf32, #tpu.memory_space<vmem>>, vector<8x8x32xf32>
    %7 = vector.shape_cast %6 : vector<8x8x32xf32> to vector<64x32xf32>
    %cst = arith.constant dense<0.000000e+00> : vector<64x512xf32>
    %8 = tpu.matmul %7, %3, %cst {dimension_numbers = #tpu.dot_dimension_numbers<[1], [0], [0], [1], [0, 0, 1, 1], [], []>} : vector<64x32xf32>, vector<32x512xf32>, vector<64x512xf32> -> vector<64x512xf32>
    %9 = vector.broadcast %5 : vector<1x512xf32> to vector<64x512xf32>
    %10 = arith.addf %8, %9 : vector<64x512xf32>
    %c0_9 = arith.constant 0 : index
    %c0_10 = arith.constant 0 : index
    %11 = vector.load %arg7[%c0_9, %c0_10] : memref<64x512xf32, #tpu.memory_space<vmem>>, vector<64x512xf32>
    tpu.vector_store %arg7[%c0_9, %c0_10], %10 {strides = array<i32>} : memref<64x512xf32, #tpu.memory_space<vmem>>, vector<64x512xf32>,
    %c0_11 = arith.constant 0 : index
    %c0_12 = arith.constant 0 : index
    %12 = vector.load %arg8[%c0_11, %c0_12] : memref<8x128xf32, #tpu.memory_space<vmem>>, vector<8x128xf32>
    %c0_13 = arith.constant 0 : index
    %c0_14 = arith.constant 0 : index
    %13 = vector.load %arg9[%c0_13, %c0_14] : memref<8x128xf32, #tpu.memory_space<vmem>>, vector<8x128xf32>
    %c0_i32_15 = arith.constant 0 : i32
    %c8_i32 = arith.constant 8 : i32
    %14 = arith.muli %c0_i32_15, %c8_i32 : i32
    %15 = tpu.assume_multiple %14, 8 : i32
    %16 = arith.index_cast %15 : i32 to index
    %c0_16 = arith.constant 0 : index
    %17 = vector.load %arg7[%16, %c0_16] : memref<64x512xf32, #tpu.memory_space<vmem>>, vector<8x512xf32>
    %cst_17 = arith.constant dense<0.000000e+00> : vector<8x512xf32>
    %18 = tpu.matmul %12, %4, %cst_17 {dimension_numbers = #tpu.dot_dimension_numbers<[1], [0], [0], [1], [0, 0, 1, 1], [], []>} : vector<8x128xf32>, vector<128x512xf32>, vector<8x512xf32> -> vector<8x512xf32>
    %19 = arith.addf %17, %18 : vector<8x512xf32>
    %20 = math.tanh %19 : vector<8x512xf32>
    %21 = vector.extract_strided_slice %20 {offsets = [0, 0], sizes = [8, 128], strides = [1, 1]} : vector<8x512xf32> to vector<8x128xf32>
    %cst_18 = arith.constant 5.000000e-01 : f32
    %22 = vector.broadcast %cst_18 : f32 to vector<8x128xf32>
    %23 = arith.mulf %22, %21 : vector<8x128xf32>
    %cst_19 = arith.constant 5.000000e-01 : f32
    %24 = vector.broadcast %cst_19 : f32 to vector<8x128xf32>
    %25 = arith.addf %23, %24 : vector<8x128xf32>
    %26 = vector.extract_strided_slice %20 {offsets = [0, 128], sizes = [8, 128], strides = [1, 1]} : vector<8x512xf32> to vector<8x128xf32>
    %cst_20 = arith.constant 5.000000e-01 : f32
    %27 = vector.broadcast %cst_20 : f32 to vector<8x128xf32>
    %28 = arith.mulf %27, %26 : vector<8x128xf32>
    %cst_21 = arith.constant 5.000000e-01 : f32
    %29 = vector.broadcast %cst_21 : f32 to vector<8x128xf32>
    %30 = arith.addf %28, %29 : vector<8x128xf32>
    %31 = vector.extract_strided_slice %20 {offsets = [0, 256], sizes = [8, 128], strides = [1, 1]} : vector<8x512xf32> to vector<8x128xf32>
    %32 = vector.extract_strided_slice %20 {offsets = [0, 384], sizes = [8, 128], strides = [1, 1]} : vector<8x512xf32> to vector<8x128xf32>
    %cst_22 = arith.constant 5.000000e-01 : f32
    %33 = vector.broadcast %cst_22 : f32 to vector<8x128xf32>
    %34 = arith.mulf %33, %32 : vector<8x128xf32>
    %cst_23 = arith.constant 5.000000e-01 : f32
    %35 = vector.broadcast %cst_23 : f32 to vector<8x128xf32>
    %36 = arith.addf %34, %35 : vector<8x128xf32>
    %37 = arith.mulf %30, %13 : vector<8x128xf32>
    %38 = arith.mulf %25, %31 : vector<8x128xf32>
    %39 = arith.addf %37, %38 : vector<8x128xf32>
    %40 = math.tanh %39 : vector<8x128xf32>
    %41 = arith.mulf %36, %40 : vector<8x128xf32>
    %42 = arith.index_cast %c0_i32_15 : i32 to index
    %c0_24 = arith.constant 0 : index
    %c0_25 = arith.constant 0 : index
    %43 = vector.load %arg6[%42, %c0_24, %c0_25] : memref<8x8x128xf32, #tpu.memory_space<vmem>>, vector<1x8x128xf32>
    %44 = vector.shape_cast %43 : vector<1x8x128xf32> to vector<8x128xf32>
    %45 = vector.shape_cast %41 : vector<8x128xf32> to vector<1x8x128xf32>
    tpu.vector_store %arg6[%42, %c0_24, %c0_25], %45 {strides = array<i32>} : memref<8x8x128xf32, #tpu.memory_space<vmem>>, vector<1x8x128xf32>,
    %c1_i32 = arith.constant 1 : i32
    %c8_i32_26 = arith.constant 8 : i32
    %46 = arith.muli %c1_i32, %c8_i32_26 : i32
    %47 = tpu.assume_multiple %46, 8 : i32
    %48 = arith.index_cast %47 : i32 to index
    %c0_27 = arith.constant 0 : index
    %49 = vector.load %arg7[%48, %c0_27] : memref<64x512xf32, #tpu.memory_space<vmem>>, vector<8x512xf32>
    %cst_28 = arith.constant dense<0.000000e+00> : vector<8x512xf32>
    %50 = tpu.matmul %41, %4, %cst_28 {dimension_numbers = #tpu.dot_dimension_numbers<[1], [0], [0], [1], [0, 0, 1, 1], [], []>} : vector<8x128xf32>, vector<128x512xf32>, vector<8x512xf32> -> vector<8x512xf32>
    %51 = arith.addf %49, %50 : vector<8x512xf32>
    %52 = math.tanh %51 : vector<8x512xf32>
    %53 = vector.extract_strided_slice %52 {offsets = [0, 0], sizes = [8, 128], strides = [1, 1]} : vector<8x512xf32> to vector<8x128xf32>
    %cst_29 = arith.constant 5.000000e-01 : f32
    %54 = vector.broadcast %cst_29 : f32 to vector<8x128xf32>
    %55 = arith.mulf %54, %53 : vector<8x128xf32>
    %cst_30 = arith.constant 5.000000e-01 : f32
    %56 = vector.broadcast %cst_30 : f32 to vector<8x128xf32>
    %57 = arith.addf %55, %56 : vector<8x128xf32>
    %58 = vector.extract_strided_slice %52 {offsets = [0, 128], sizes = [8, 128], strides = [1, 1]} : vector<8x512xf32> to vector<8x128xf32>
    %cst_31 = arith.constant 5.000000e-01 : f32
    %59 = vector.broadcast %cst_31 : f32 to vector<8x128xf32>
    %60 = arith.mulf %59, %58 : vector<8x128xf32>
    %cst_32 = arith.constant 5.000000e-01 : f32
    %61 = vector.broadcast %cst_32 : f32 to vector<8x128xf32>
    %62 = arith.addf %60, %61 : vector<8x128xf32>
    %63 = vector.extract_strided_slice %52 {offsets = [0, 256], sizes = [8, 128], strides = [1, 1]} : vector<8x512xf32> to vector<8x128xf32>
    %64 = vector.extract_strided_slice %52 {offsets = [0, 384], sizes = [8, 128], strides = [1, 1]} : vector<8x512xf32> to vector<8x128xf32>
    %cst_33 = arith.constant 5.000000e-01 : f32
    %65 = vector.broadcast %cst_33 : f32 to vector<8x128xf32>
    %66 = arith.mulf %65, %64 : vector<8x128xf32>
    %cst_34 = arith.constant 5.000000e-01 : f32
    %67 = vector.broadcast %cst_34 : f32 to vector<8x128xf32>
    %68 = arith.addf %66, %67 : vector<8x128xf32>
    %69 = arith.mulf %62, %39 : vector<8x128xf32>
    %70 = arith.mulf %57, %63 : vector<8x128xf32>
    %71 = arith.addf %69, %70 : vector<8x128xf32>
    %72 = math.tanh %71 : vector<8x128xf32>
    %73 = arith.mulf %68, %72 : vector<8x128xf32>
    %74 = arith.index_cast %c1_i32 : i32 to index
    %c0_35 = arith.constant 0 : index
    %c0_36 = arith.constant 0 : index
    %75 = vector.load %arg6[%74, %c0_35, %c0_36] : memref<8x8x128xf32, #tpu.memory_space<vmem>>, vector<1x8x128xf32>
    %76 = vector.shape_cast %75 : vector<1x8x128xf32> to vector<8x128xf32>
    %77 = vector.shape_cast %73 : vector<8x128xf32> to vector<1x8x128xf32>
    tpu.vector_store %arg6[%74, %c0_35, %c0_36], %77 {strides = array<i32>} : memref<8x8x128xf32, #tpu.memory_space<vmem>>, vector<1x8x128xf32>,
    %c2_i32 = arith.constant 2 : i32
    %c8_i32_37 = arith.constant 8 : i32
    %78 = arith.muli %c2_i32, %c8_i32_37 : i32
    %79 = tpu.assume_multiple %78, 8 : i32
    %80 = arith.index_cast %79 : i32 to index
    %c0_38 = arith.constant 0 : index
    %81 = vector.load %arg7[%80, %c0_38] : memref<64x512xf32, #tpu.memory_space<vmem>>, vector<8x512xf32>
    %cst_39 = arith.constant dense<0.000000e+00> : vector<8x512xf32>
    %82 = tpu.matmul %73, %4, %cst_39 {dimension_numbers = #tpu.dot_dimension_numbers<[1], [0], [0], [1], [0, 0, 1, 1], [], []>} : vector<8x128xf32>, vector<128x512xf32>, vector<8x512xf32> -> vector<8x512xf32>
    %83 = arith.addf %81, %82 : vector<8x512xf32>
    %84 = math.tanh %83 : vector<8x512xf32>
    %85 = vector.extract_strided_slice %84 {offsets = [0, 0], sizes = [8, 128], strides = [1, 1]} : vector<8x512xf32> to vector<8x128xf32>
    %cst_40 = arith.constant 5.000000e-01 : f32
    %86 = vector.broadcast %cst_40 : f32 to vector<8x128xf32>
    %87 = arith.mulf %86, %85 : vector<8x128xf32>
    %cst_41 = arith.constant 5.000000e-01 : f32
    %88 = vector.broadcast %cst_41 : f32 to vector<8x128xf32>
    %89 = arith.addf %87, %88 : vector<8x128xf32>
    %90 = vector.extract_strided_slice %84 {offsets = [0, 128], sizes = [8, 128], strides = [1, 1]} : vector<8x512xf32> to vector<8x128xf32>
    %cst_42 = arith.constant 5.000000e-01 : f32
    %91 = vector.broadcast %cst_42 : f32 to vector<8x128xf32>
    %92 = arith.mulf %91, %90 : vector<8x128xf32>
    %cst_43 = arith.constant 5.000000e-01 : f32
    %93 = vector.broadcast %cst_43 : f32 to vector<8x128xf32>
    %94 = arith.addf %92, %93 : vector<8x128xf32>
    %95 = vector.extract_strided_slice %84 {offsets = [0, 256], sizes = [8, 128], strides = [1, 1]} : vector<8x512xf32> to vector<8x128xf32>
    %96 = vector.extract_strided_slice %84 {offsets = [0, 384], sizes = [8, 128], strides = [1, 1]} : vector<8x512xf32> to vector<8x128xf32>
    %cst_44 = arith.constant 5.000000e-01 : f32
    %97 = vector.broadcast %cst_44 : f32 to vector<8x128xf32>
    %98 = arith.mulf %97, %96 : vector<8x128xf32>
    %cst_45 = arith.constant 5.000000e-01 : f32
    %99 = vector.broadcast %cst_45 : f32 to vector<8x128xf32>
    %100 = arith.addf %98, %99 : vector<8x128xf32>
    %101 = arith.mulf %94, %71 : vector<8x128xf32>
    %102 = arith.mulf %89, %95 : vector<8x128xf32>
    %103 = arith.addf %101, %102 : vector<8x128xf32>
    %104 = math.tanh %103 : vector<8x128xf32>
    %105 = arith.mulf %100, %104 : vector<8x128xf32>
    %106 = arith.index_cast %c2_i32 : i32 to index
    %c0_46 = arith.constant 0 : index
    %c0_47 = arith.constant 0 : index
    %107 = vector.load %arg6[%106, %c0_46, %c0_47] : memref<8x8x128xf32, #tpu.memory_space<vmem>>, vector<1x8x128xf32>
    %108 = vector.shape_cast %107 : vector<1x8x128xf32> to vector<8x128xf32>
    %109 = vector.shape_cast %105 : vector<8x128xf32> to vector<1x8x128xf32>
    tpu.vector_store %arg6[%106, %c0_46, %c0_47], %109 {strides = array<i32>} : memref<8x8x128xf32, #tpu.memory_space<vmem>>, vector<1x8x128xf32>,
    %c3_i32 = arith.constant 3 : i32
    %c8_i32_48 = arith.constant 8 : i32
    %110 = arith.muli %c3_i32, %c8_i32_48 : i32
    %111 = tpu.assume_multiple %110, 8 : i32
    %112 = arith.index_cast %111 : i32 to index
    %c0_49 = arith.constant 0 : index
    %113 = vector.load %arg7[%112, %c0_49] : memref<64x512xf32, #tpu.memory_space<vmem>>, vector<8x512xf32>
    %cst_50 = arith.constant dense<0.000000e+00> : vector<8x512xf32>
    %114 = tpu.matmul %105, %4, %cst_50 {dimension_numbers = #tpu.dot_dimension_numbers<[1], [0], [0], [1], [0, 0, 1, 1], [], []>} : vector<8x128xf32>, vector<128x512xf32>, vector<8x512xf32> -> vector<8x512xf32>
    %115 = arith.addf %113, %114 : vector<8x512xf32>
    %116 = math.tanh %115 : vector<8x512xf32>
    %117 = vector.extract_strided_slice %116 {offsets = [0, 0], sizes = [8, 128], strides = [1, 1]} : vector<8x512xf32> to vector<8x128xf32>
    %cst_51 = arith.constant 5.000000e-01 : f32
    %118 = vector.broadcast %cst_51 : f32 to vector<8x128xf32>
    %119 = arith.mulf %118, %117 : vector<8x128xf32>
    %cst_52 = arith.constant 5.000000e-01 : f32
    %120 = vector.broadcast %cst_52 : f32 to vector<8x128xf32>
    %121 = arith.addf %119, %120 : vector<8x128xf32>
    %122 = vector.extract_strided_slice %116 {offsets = [0, 128], sizes = [8, 128], strides = [1, 1]} : vector<8x512xf32> to vector<8x128xf32>
    %cst_53 = arith.constant 5.000000e-01 : f32
    %123 = vector.broadcast %cst_53 : f32 to vector<8x128xf32>
    %124 = arith.mulf %123, %122 : vector<8x128xf32>
    %cst_54 = arith.constant 5.000000e-01 : f32
    %125 = vector.broadcast %cst_54 : f32 to vector<8x128xf32>
    %126 = arith.addf %124, %125 : vector<8x128xf32>
    %127 = vector.extract_strided_slice %116 {offsets = [0, 256], sizes = [8, 128], strides = [1, 1]} : vector<8x512xf32> to vector<8x128xf32>
    %128 = vector.extract_strided_slice %116 {offsets = [0, 384], sizes = [8, 128], strides = [1, 1]} : vector<8x512xf32> to vector<8x128xf32>
    %cst_55 = arith.constant 5.000000e-01 : f32
    %129 = vector.broadcast %cst_55 : f32 to vector<8x128xf32>
    %130 = arith.mulf %129, %128 : vector<8x128xf32>
    %cst_56 = arith.constant 5.000000e-01 : f32
    %131 = vector.broadcast %cst_56 : f32 to vector<8x128xf32>
    %132 = arith.addf %130, %131 : vector<8x128xf32>
    %133 = arith.mulf %126, %103 : vector<8x128xf32>
    %134 = arith.mulf %121, %127 : vector<8x128xf32>
    %135 = arith.addf %133, %134 : vector<8x128xf32>
    %136 = math.tanh %135 : vector<8x128xf32>
    %137 = arith.mulf %132, %136 : vector<8x128xf32>
    %138 = arith.index_cast %c3_i32 : i32 to index
    %c0_57 = arith.constant 0 : index
    %c0_58 = arith.constant 0 : index
    %139 = vector.load %arg6[%138, %c0_57, %c0_58] : memref<8x8x128xf32, #tpu.memory_space<vmem>>, vector<1x8x128xf32>
    %140 = vector.shape_cast %139 : vector<1x8x128xf32> to vector<8x128xf32>
    %141 = vector.shape_cast %137 : vector<8x128xf32> to vector<1x8x128xf32>
    tpu.vector_store %arg6[%138, %c0_57, %c0_58], %141 {strides = array<i32>} : memref<8x8x128xf32, #tpu.memory_space<vmem>>, vector<1x8x128xf32>,
    %c4_i32 = arith.constant 4 : i32
    %c8_i32_59 = arith.constant 8 : i32
    %142 = arith.muli %c4_i32, %c8_i32_59 : i32
    %143 = tpu.assume_multiple %142, 8 : i32
    %144 = arith.index_cast %143 : i32 to index
    %c0_60 = arith.constant 0 : index
    %145 = vector.load %arg7[%144, %c0_60] : memref<64x512xf32, #tpu.memory_space<vmem>>, vector<8x512xf32>
    %cst_61 = arith.constant dense<0.000000e+00> : vector<8x512xf32>
    %146 = tpu.matmul %137, %4, %cst_61 {dimension_numbers = #tpu.dot_dimension_numbers<[1], [0], [0], [1], [0, 0, 1, 1], [], []>} : vector<8x128xf32>, vector<128x512xf32>, vector<8x512xf32> -> vector<8x512xf32>
    %147 = arith.addf %145, %146 : vector<8x512xf32>
    %148 = math.tanh %147 : vector<8x512xf32>
    %149 = vector.extract_strided_slice %148 {offsets = [0, 0], sizes = [8, 128], strides = [1, 1]} : vector<8x512xf32> to vector<8x128xf32>
    %cst_62 = arith.constant 5.000000e-01 : f32
    %150 = vector.broadcast %cst_62 : f32 to vector<8x128xf32>
    %151 = arith.mulf %150, %149 : vector<8x128xf32>
    %cst_63 = arith.constant 5.000000e-01 : f32
    %152 = vector.broadcast %cst_63 : f32 to vector<8x128xf32>
    %153 = arith.addf %151, %152 : vector<8x128xf32>
    %154 = vector.extract_strided_slice %148 {offsets = [0, 128], sizes = [8, 128], strides = [1, 1]} : vector<8x512xf32> to vector<8x128xf32>
    %cst_64 = arith.constant 5.000000e-01 : f32
    %155 = vector.broadcast %cst_64 : f32 to vector<8x128xf32>
    %156 = arith.mulf %155, %154 : vector<8x128xf32>
    %cst_65 = arith.constant 5.000000e-01 : f32
    %157 = vector.broadcast %cst_65 : f32 to vector<8x128xf32>
    %158 = arith.addf %156, %157 : vector<8x128xf32>
    %159 = vector.extract_strided_slice %148 {offsets = [0, 256], sizes = [8, 128], strides = [1, 1]} : vector<8x512xf32> to vector<8x128xf32>
    %160 = vector.extract_strided_slice %148 {offsets = [0, 384], sizes = [8, 128], strides = [1, 1]} : vector<8x512xf32> to vector<8x128xf32>
    %cst_66 = arith.constant 5.000000e-01 : f32
    %161 = vector.broadcast %cst_66 : f32 to vector<8x128xf32>
    %162 = arith.mulf %161, %160 : vector<8x128xf32>
    %cst_67 = arith.constant 5.000000e-01 : f32
    %163 = vector.broadcast %cst_67 : f32 to vector<8x128xf32>
    %164 = arith.addf %162, %163 : vector<8x128xf32>
    %165 = arith.mulf %158, %135 : vector<8x128xf32>
    %166 = arith.mulf %153, %159 : vector<8x128xf32>
    %167 = arith.addf %165, %166 : vector<8x128xf32>
    %168 = math.tanh %167 : vector<8x128xf32>
    %169 = arith.mulf %164, %168 : vector<8x128xf32>
    %170 = arith.index_cast %c4_i32 : i32 to index
    %c0_68 = arith.constant 0 : index
    %c0_69 = arith.constant 0 : index
    %171 = vector.load %arg6[%170, %c0_68, %c0_69] : memref<8x8x128xf32, #tpu.memory_space<vmem>>, vector<1x8x128xf32>
    %172 = vector.shape_cast %171 : vector<1x8x128xf32> to vector<8x128xf32>
    %173 = vector.shape_cast %169 : vector<8x128xf32> to vector<1x8x128xf32>
    tpu.vector_store %arg6[%170, %c0_68, %c0_69], %173 {strides = array<i32>} : memref<8x8x128xf32, #tpu.memory_space<vmem>>, vector<1x8x128xf32>,
    %c5_i32 = arith.constant 5 : i32
    %c8_i32_70 = arith.constant 8 : i32
    %174 = arith.muli %c5_i32, %c8_i32_70 : i32
    %175 = tpu.assume_multiple %174, 8 : i32
    %176 = arith.index_cast %175 : i32 to index
    %c0_71 = arith.constant 0 : index
    %177 = vector.load %arg7[%176, %c0_71] : memref<64x512xf32, #tpu.memory_space<vmem>>, vector<8x512xf32>
    %cst_72 = arith.constant dense<0.000000e+00> : vector<8x512xf32>
    %178 = tpu.matmul %169, %4, %cst_72 {dimension_numbers = #tpu.dot_dimension_numbers<[1], [0], [0], [1], [0, 0, 1, 1], [], []>} : vector<8x128xf32>, vector<128x512xf32>, vector<8x512xf32> -> vector<8x512xf32>
    %179 = arith.addf %177, %178 : vector<8x512xf32>
    %180 = math.tanh %179 : vector<8x512xf32>
    %181 = vector.extract_strided_slice %180 {offsets = [0, 0], sizes = [8, 128], strides = [1, 1]} : vector<8x512xf32> to vector<8x128xf32>
    %cst_73 = arith.constant 5.000000e-01 : f32
    %182 = vector.broadcast %cst_73 : f32 to vector<8x128xf32>
    %183 = arith.mulf %182, %181 : vector<8x128xf32>
    %cst_74 = arith.constant 5.000000e-01 : f32
    %184 = vector.broadcast %cst_74 : f32 to vector<8x128xf32>
    %185 = arith.addf %183, %184 : vector<8x128xf32>
    %186 = vector.extract_strided_slice %180 {offsets = [0, 128], sizes = [8, 128], strides = [1, 1]} : vector<8x512xf32> to vector<8x128xf32>
    %cst_75 = arith.constant 5.000000e-01 : f32
    %187 = vector.broadcast %cst_75 : f32 to vector<8x128xf32>
    %188 = arith.mulf %187, %186 : vector<8x128xf32>
    %cst_76 = arith.constant 5.000000e-01 : f32
    %189 = vector.broadcast %cst_76 : f32 to vector<8x128xf32>
    %190 = arith.addf %188, %189 : vector<8x128xf32>
    %191 = vector.extract_strided_slice %180 {offsets = [0, 256], sizes = [8, 128], strides = [1, 1]} : vector<8x512xf32> to vector<8x128xf32>
    %192 = vector.extract_strided_slice %180 {offsets = [0, 384], sizes = [8, 128], strides = [1, 1]} : vector<8x512xf32> to vector<8x128xf32>
    %cst_77 = arith.constant 5.000000e-01 : f32
    %193 = vector.broadcast %cst_77 : f32 to vector<8x128xf32>
    %194 = arith.mulf %193, %192 : vector<8x128xf32>
    %cst_78 = arith.constant 5.000000e-01 : f32
    %195 = vector.broadcast %cst_78 : f32 to vector<8x128xf32>
    %196 = arith.addf %194, %195 : vector<8x128xf32>
    %197 = arith.mulf %190, %167 : vector<8x128xf32>
    %198 = arith.mulf %185, %191 : vector<8x128xf32>
    %199 = arith.addf %197, %198 : vector<8x128xf32>
    %200 = math.tanh %199 : vector<8x128xf32>
    %201 = arith.mulf %196, %200 : vector<8x128xf32>
    %202 = arith.index_cast %c5_i32 : i32 to index
    %c0_79 = arith.constant 0 : index
    %c0_80 = arith.constant 0 : index
    %203 = vector.load %arg6[%202, %c0_79, %c0_80] : memref<8x8x128xf32, #tpu.memory_space<vmem>>, vector<1x8x128xf32>
    %204 = vector.shape_cast %203 : vector<1x8x128xf32> to vector<8x128xf32>
    %205 = vector.shape_cast %201 : vector<8x128xf32> to vector<1x8x128xf32>
    tpu.vector_store %arg6[%202, %c0_79, %c0_80], %205 {strides = array<i32>} : memref<8x8x128xf32, #tpu.memory_space<vmem>>, vector<1x8x128xf32>,
    %c6_i32 = arith.constant 6 : i32
    %c8_i32_81 = arith.constant 8 : i32
    %206 = arith.muli %c6_i32, %c8_i32_81 : i32
    %207 = tpu.assume_multiple %206, 8 : i32
    %208 = arith.index_cast %207 : i32 to index
    %c0_82 = arith.constant 0 : index
    %209 = vector.load %arg7[%208, %c0_82] : memref<64x512xf32, #tpu.memory_space<vmem>>, vector<8x512xf32>
    %cst_83 = arith.constant dense<0.000000e+00> : vector<8x512xf32>
    %210 = tpu.matmul %201, %4, %cst_83 {dimension_numbers = #tpu.dot_dimension_numbers<[1], [0], [0], [1], [0, 0, 1, 1], [], []>} : vector<8x128xf32>, vector<128x512xf32>, vector<8x512xf32> -> vector<8x512xf32>
    %211 = arith.addf %209, %210 : vector<8x512xf32>
    %212 = math.tanh %211 : vector<8x512xf32>
    %213 = vector.extract_strided_slice %212 {offsets = [0, 0], sizes = [8, 128], strides = [1, 1]} : vector<8x512xf32> to vector<8x128xf32>
    %cst_84 = arith.constant 5.000000e-01 : f32
    %214 = vector.broadcast %cst_84 : f32 to vector<8x128xf32>
    %215 = arith.mulf %214, %213 : vector<8x128xf32>
    %cst_85 = arith.constant 5.000000e-01 : f32
    %216 = vector.broadcast %cst_85 : f32 to vector<8x128xf32>
    %217 = arith.addf %215, %216 : vector<8x128xf32>
    %218 = vector.extract_strided_slice %212 {offsets = [0, 128], sizes = [8, 128], strides = [1, 1]} : vector<8x512xf32> to vector<8x128xf32>
    %cst_86 = arith.constant 5.000000e-01 : f32
    %219 = vector.broadcast %cst_86 : f32 to vector<8x128xf32>
    %220 = arith.mulf %219, %218 : vector<8x128xf32>
    %cst_87 = arith.constant 5.000000e-01 : f32
    %221 = vector.broadcast %cst_87 : f32 to vector<8x128xf32>
    %222 = arith.addf %220, %221 : vector<8x128xf32>
    %223 = vector.extract_strided_slice %212 {offsets = [0, 256], sizes = [8, 128], strides = [1, 1]} : vector<8x512xf32> to vector<8x128xf32>
    %224 = vector.extract_strided_slice %212 {offsets = [0, 384], sizes = [8, 128], strides = [1, 1]} : vector<8x512xf32> to vector<8x128xf32>
    %cst_88 = arith.constant 5.000000e-01 : f32
    %225 = vector.broadcast %cst_88 : f32 to vector<8x128xf32>
    %226 = arith.mulf %225, %224 : vector<8x128xf32>
    %cst_89 = arith.constant 5.000000e-01 : f32
    %227 = vector.broadcast %cst_89 : f32 to vector<8x128xf32>
    %228 = arith.addf %226, %227 : vector<8x128xf32>
    %229 = arith.mulf %222, %199 : vector<8x128xf32>
    %230 = arith.mulf %217, %223 : vector<8x128xf32>
    %231 = arith.addf %229, %230 : vector<8x128xf32>
    %232 = math.tanh %231 : vector<8x128xf32>
    %233 = arith.mulf %228, %232 : vector<8x128xf32>
    %234 = arith.index_cast %c6_i32 : i32 to index
    %c0_90 = arith.constant 0 : index
    %c0_91 = arith.constant 0 : index
    %235 = vector.load %arg6[%234, %c0_90, %c0_91] : memref<8x8x128xf32, #tpu.memory_space<vmem>>, vector<1x8x128xf32>
    %236 = vector.shape_cast %235 : vector<1x8x128xf32> to vector<8x128xf32>
    %237 = vector.shape_cast %233 : vector<8x128xf32> to vector<1x8x128xf32>
    tpu.vector_store %arg6[%234, %c0_90, %c0_91], %237 {strides = array<i32>} : memref<8x8x128xf32, #tpu.memory_space<vmem>>, vector<1x8x128xf32>,
    %c7_i32 = arith.constant 7 : i32
    %c8_i32_92 = arith.constant 8 : i32
    %238 = arith.muli %c7_i32, %c8_i32_92 : i32
    %239 = tpu.assume_multiple %238, 8 : i32
    %240 = arith.index_cast %239 : i32 to index
    %c0_93 = arith.constant 0 : index
    %241 = vector.load %arg7[%240, %c0_93] : memref<64x512xf32, #tpu.memory_space<vmem>>, vector<8x512xf32>
    %cst_94 = arith.constant dense<0.000000e+00> : vector<8x512xf32>
    %242 = tpu.matmul %233, %4, %cst_94 {dimension_numbers = #tpu.dot_dimension_numbers<[1], [0], [0], [1], [0, 0, 1, 1], [], []>} : vector<8x128xf32>, vector<128x512xf32>, vector<8x512xf32> -> vector<8x512xf32>
    %243 = arith.addf %241, %242 : vector<8x512xf32>
    %244 = math.tanh %243 : vector<8x512xf32>
    %245 = vector.extract_strided_slice %244 {offsets = [0, 0], sizes = [8, 128], strides = [1, 1]} : vector<8x512xf32> to vector<8x128xf32>
    %cst_95 = arith.constant 5.000000e-01 : f32
    %246 = vector.broadcast %cst_95 : f32 to vector<8x128xf32>
    %247 = arith.mulf %246, %245 : vector<8x128xf32>
    %cst_96 = arith.constant 5.000000e-01 : f32
    %248 = vector.broadcast %cst_96 : f32 to vector<8x128xf32>
    %249 = arith.addf %247, %248 : vector<8x128xf32>
    %250 = vector.extract_strided_slice %244 {offsets = [0, 128], sizes = [8, 128], strides = [1, 1]} : vector<8x512xf32> to vector<8x128xf32>
    %cst_97 = arith.constant 5.000000e-01 : f32
    %251 = vector.broadcast %cst_97 : f32 to vector<8x128xf32>
    %252 = arith.mulf %251, %250 : vector<8x128xf32>
    %cst_98 = arith.constant 5.000000e-01 : f32
    %253 = vector.broadcast %cst_98 : f32 to vector<8x128xf32>
    %254 = arith.addf %252, %253 : vector<8x128xf32>
    %255 = vector.extract_strided_slice %244 {offsets = [0, 256], sizes = [8, 128], strides = [1, 1]} : vector<8x512xf32> to vector<8x128xf32>
    %256 = vector.extract_strided_slice %244 {offsets = [0, 384], sizes = [8, 128], strides = [1, 1]} : vector<8x512xf32> to vector<8x128xf32>
    %cst_99 = arith.constant 5.000000e-01 : f32
    %257 = vector.broadcast %cst_99 : f32 to vector<8x128xf32>
    %258 = arith.mulf %257, %256 : vector<8x128xf32>
    %cst_100 = arith.constant 5.000000e-01 : f32
    %259 = vector.broadcast %cst_100 : f32 to vector<8x128xf32>
    %260 = arith.addf %258, %259 : vector<8x128xf32>
    %261 = arith.mulf %254, %231 : vector<8x128xf32>
    %262 = arith.mulf %249, %255 : vector<8x128xf32>
    %263 = arith.addf %261, %262 : vector<8x128xf32>
    %264 = math.tanh %263 : vector<8x128xf32>
    %265 = arith.mulf %260, %264 : vector<8x128xf32>
    %266 = arith.index_cast %c7_i32 : i32 to index
    %c0_101 = arith.constant 0 : index
    %c0_102 = arith.constant 0 : index
    %267 = vector.load %arg6[%266, %c0_101, %c0_102] : memref<8x8x128xf32, #tpu.memory_space<vmem>>, vector<1x8x128xf32>
    %268 = vector.shape_cast %267 : vector<1x8x128xf32> to vector<8x128xf32>
    %269 = vector.shape_cast %265 : vector<8x128xf32> to vector<1x8x128xf32>
    tpu.vector_store %arg6[%266, %c0_101, %c0_102], %269 {strides = array<i32>} : memref<8x8x128xf32, #tpu.memory_space<vmem>>, vector<1x8x128xf32>,
    %c8_i32_103 = arith.constant 8 : i32
    %c0_104 = arith.constant 0 : index
    %c0_105 = arith.constant 0 : index
    %270 = vector.load %arg8[%c0_104, %c0_105] : memref<8x128xf32, #tpu.memory_space<vmem>>, vector<8x128xf32>
    tpu.vector_store %arg8[%c0_104, %c0_105], %265 {strides = array<i32>} : memref<8x128xf32, #tpu.memory_space<vmem>>, vector<8x128xf32>,
    %c0_106 = arith.constant 0 : index
    %c0_107 = arith.constant 0 : index
    %271 = vector.load %arg9[%c0_106, %c0_107] : memref<8x128xf32, #tpu.memory_space<vmem>>, vector<8x128xf32>
    tpu.vector_store %arg9[%c0_106, %c0_107], %263 {strides = array<i32>} : memref<8x128xf32, #tpu.memory_space<vmem>>, vector<8x128xf32>,
    return
  }
  func.func @transform_0(%arg0: i32, %arg1: i32) -> (i32, i32, i32) {
    %c0_i32 = arith.constant 0 : i32
    %c0_i32_0 = arith.constant 0 : i32
    return %arg1, %arg0, %c0_i32 : i32, i32, i32
  }
  func.func @transform_1(%arg0: i32, %arg1: i32) -> (i32, i32) {
    %c0_i32 = arith.constant 0 : i32
    %c0_i32_0 = arith.constant 0 : i32
    %c0_i32_1 = arith.constant 0 : i32
    return %c0_i32, %c0_i32_0 : i32, i32
  }
  func.func @transform_2(%arg0: i32, %arg1: i32) -> (i32, i32) {
    %c0_i32 = arith.constant 0 : i32
    %c0_i32_0 = arith.constant 0 : i32
    %c0_i32_1 = arith.constant 0 : i32
    return %c0_i32, %c0_i32_0 : i32, i32
  }
  func.func @transform_3(%arg0: i32, %arg1: i32) -> (i32, i32) {
    %c0_i32 = arith.constant 0 : i32
    %c0_i32_0 = arith.constant 0 : i32
    %c0_i32_1 = arith.constant 0 : i32
    return %c0_i32, %c0_i32_0 : i32, i32
  }
  func.func @transform_4(%arg0: i32, %arg1: i32) -> (i32, i32, i32) {
    %c0_i32 = arith.constant 0 : i32
    %c0_i32_0 = arith.constant 0 : i32
    return %arg1, %arg0, %c0_i32 : i32, i32, i32
  }
}

</mosaic_0001>

<llo_original>
// kernel: baseline_tagger_forward.1
$region0: #{baseline_tagger_forward.1}
  #allocation0 [shape = 'u32[]', space=smem, size = 0x4, offset = 0x4, fixed_abs, tag = 'smem constant byte address 0x4 - core index']
  #allocation1 [shape = 'u32[144,128]{1,0:T(1,128)}', space=vmem, size = 0x12000, scoped, tag = 'internal scratch']
  #allocation2 [shape = 'f32[64,512]{1,0:T(8,128)}', space=vmem, size = 0x20000, scoped, tag = 'scratch operand']
  #allocation3 [shape = 'f32[8,128]{1,0:T(8,128)}', space=vmem, size = 0x1000, scoped, tag = 'scratch operand']
  #allocation4 [shape = 'f32[8,128]{1,0:T(8,128)}', space=vmem, size = 0x1000, scoped, tag = 'scratch operand']
  %s0 = inlined_call_operand.vmem [shape: f32[24,16,32], index: 0, kind: input, shape index: {}]
  %s1 = inlined_call_operand.vmem [shape: f32[32,512], index: 1, kind: input, shape index: {}]
  %s2 = inlined_call_operand.vmem [shape: f32[128,512], index: 2, kind: input, shape index: {}]
  %s3 = inlined_call_operand.vmem [shape: f32[1,512], index: 3, kind: input, shape index: {}]
  %s4 = inlined_call_operand.vmem [shape: f32[24,16,128], index: 4, kind: output, shape index: {}]
  %s5 = sld [smem:[#allocation0]]
  $region125: #{baseline_tagger_forward.1} parent=0
    _
  %s7 = ssub.s32 1, %s5
  %s8 = scalar_select 0, %s7, %s5
  $region1: #{baseline_tagger_forward.1} parent=0
    #allocation5 [shape = 'u8[65536]{0}', space=vmem, size = 0x10000, scoped, tag = 'input window, operand 0']
    #allocation6 [shape = 'u8[65536]{0}', space=vmem, size = 0x10000, scoped, tag = 'output window, operand 0']
    loop: start=0, step=1, limit=8
    $region2: #{baseline_tagger_forward.1} parent=1 // loop_pre_header
      _
    $region3: #{baseline_tagger_forward.1} parent=1 // loop_header
      %s10 = sphi 0, %s14
      %p11 = scmp.ge.s32.totalorder %s10, 8
      %s17 = sphi 0, %s29
      %s18 = sphi 0, %s25
      %s19 = sphi 0, %s17
      %s20 = sphi 0, %s18
      %s21 = sphi 0, %s19
      %s22 = sphi 0, %s20
      %s34 = sphi 0, %s36
      %s37 = sphi 0, %s34
      %s38 = sphi 0, %s37
      %s54 = sphi 0, %s38
      %s58 = sphi 0, %s58
      %s60 = sphi 0, %s58
      %s61 = sphi 0, %s60
      %s75 = sphi 0, %s61
      %s79 = sphi 0, %s79
      %s81 = sphi 0, %s79
      %s82 = sphi 0, %s81
      %s96 = sphi 0, %s82
      %s100 = sphi 0, %s100
      %s102 = sphi 0, %s100
      %s103 = sphi 0, %s102
      %s117 = sphi 0, %s103
      %s125 = sphi 0, %s127
      %s128 = sphi 0, %s125
      %s129 = sphi 0, %s128
      %s145 = sphi 0, %s129
    $region4: #{baseline_tagger_forward.1} parent=1 // loop_header_branch
      %13 = sbr.rel (%p11) target = $region8
    $region5: #{baseline_tagger_forward.1} parent=1 // loop_body
      %s15 = ssub.s32 %s10, 1
      %s16 = ssub.s32 %s10, 2
      %s23 = sadd.s32 1, %s18
      %p24 = scmp.ge.s32.totalorder %s23, 3
      %s25 = scalar_select %p24, 0, %s23
      %s26 = sadd.s32 1, %s17
      %s27 = scalar_select %p24, %s26, %s17
      %p28 = scmp.ge.s32.totalorder %s27, 2
      %s29 = scalar_select %p28, 0, %s27
      %s30 = ssub.s32 %s18, %s25
      %s31 = ssub.s32 %s17, %s29
      %s32 = sor.u32 %s30, %s31
      %p33 = scmp.eq.s32.totalorder %s32, 0
      %s35 = sadd.s32 %s34, 1
      %s36 = scalar_select %p33, %s34, %s35
      %p39 = pneg %p33
      %p40 = scmp.eq.s32.totalorder %s10, 5
      %p41 = por %p39, %p40
      %p42 = scmp.ne.s32.totalorder %s34, %s37
      %p43 = scmp.eq.s32.totalorder %s10, 0
      %p44 = por %p42, %p43
      %p45 = scmp.ne.s32.totalorder %s34, %s37
      %p46 = scmp.eq.s32.totalorder %s15, 5
      %p47 = por %p45, %p46
      %p48 = scmp.ne.s32.totalorder %s37, %s38
      %p49 = scmp.eq.s32.totalorder %s15, 0
      %p50 = por %p48, %p49
      %p51 = scmp.ne.s32.totalorder %s37, %s38
      %p52 = scmp.eq.s32.totalorder %s16, 5
      %p53 = por %p51, %p52
      %p55 = scmp.ne.s32.totalorder %s38, %s54
      %p56 = scmp.eq.s32.totalorder %s16, 0
      %p57 = por %p55, %p56
      %s59 = sadd.s32 %s58, 1
      %p62 = scmp.eq.s32.totalorder %s10, 5
      %p63 = scmp.ne.s32.totalorder %s58, %s60
      %p64 = scmp.eq.s32.totalorder %s10, 0
      %p65 = por %p63, %p64
      %p66 = scmp.ne.s32.totalorder %s58, %s60
      %p67 = scmp.eq.s32.totalorder %s15, 5
      %p68 = por %p66, %p67
      %p69 = scmp.ne.s32.totalorder %s60, %s61
      %p70 = scmp.eq.s32.totalorder %s15, 0
      %p71 = por %p69, %p70
      %p72 = scmp.ne.s32.totalorder %s60, %s61
      %p73 = scmp.eq.s32.totalorder %s16, 5
      %p74 = por %p72, %p73
      %p76 = scmp.ne.s32.totalorder %s61, %s75
      %p77 = scmp.eq.s32.totalorder %s16, 0
      %p78 = por %p76, %p77
      %s80 = sadd.s32 %s79, 1
      %p83 = scmp.eq.s32.totalorder %s10, 5
      %p84 = scmp.ne.s32.totalorder %s79, %s81
      %p85 = scmp.eq.s32.totalorder %s10, 0
      %p86 = por %p84, %p85
      %p87 = scmp.ne.s32.totalorder %s79, %s81
      %p88 = scmp.eq.s32.totalorder %s15, 5
      %p89 = por %p87, %p88
      %p90 = scmp.ne.s32.totalorder %s81, %s82
      %p91 = scmp.eq.s32.totalorder %s15, 0
      %p92 = por %p90, %p91
      %p93 = scmp.ne.s32.totalorder %s81, %s82
      %p94 = scmp.eq.s32.totalorder %s16, 5
      %p95 = por %p93, %p94
      %p97 = scmp.ne.s32.totalorder %s82, %s96
      %p98 = scmp.eq.s32.totalorder %s16, 0
      %p99 = por %p97, %p98
      %s101 = sadd.s32 %s100, 1
      %p104 = scmp.eq.s32.totalorder %s10, 5
      %p105 = scmp.ne.s32.totalorder %s100, %s102
      %p106 = scmp.eq.s32.totalorder %s10, 0
      %p107 = por %p105, %p106
      %p108 = scmp.ne.s32.totalorder %s100, %s102
      %p109 = scmp.eq.s32.totalorder %s15, 5
      %p110 = por %p108, %p109
      %p111 = scmp.ne.s32.totalorder %s102, %s103
      %p112 = scmp.eq.s32.totalorder %s15, 0
      %p113 = por %p111, %p112
      %p114 = scmp.ne.s32.totalorder %s102, %s103
      %p115 = scmp.eq.s32.totalorder %s16, 5
      %p116 = por %p114, %p115
      %p118 = scmp.ne.s32.totalorder %s103, %s117
      %p119 = scmp.eq.s32.totalorder %s16, 0
      %p120 = por %p118, %p119
      %s121 = ssub.s32 %s18, %s25
      %s122 = ssub.s32 %s17, %s29
      %s123 = sor.u32 %s121, %s122
      %p124 = scmp.eq.s32.totalorder %s123, 0
      %s126 = sadd.s32 %s125, 1
      %s127 = scalar_select %p124, %s125, %s126
      %p130 = pneg %p124
      %p131 = scmp.eq.s32.totalorder %s10, 5
      %p132 = por %p130, %p131
      %p133 = scmp.ne.s32.totalorder %s125, %s128
      %p134 = scmp.eq.s32.totalorder %s10, 0
      %p135 = por %p133, %p134
      %p136 = scmp.ne.s32.totalorder %s125, %s128
      %p137 = scmp.eq.s32.totalorder %s15, 5
      %p138 = por %p136, %p137
      %p139 = scmp.ne.s32.totalorder %s128, %s129
      %p140 = scmp.eq.s32.totalorder %s15, 0
      %p141 = por %p139, %p140
      %p142 = scmp.ne.s32.totalorder %s128, %s129
      %p143 = scmp.eq.s32.totalorder %s16, 5
      %p144 = por %p142, %p143
      %p146 = scmp.ne.s32.totalorder %s129, %s145
      %p147 = scmp.eq.s32.totalorder %s16, 0
      %p148 = por %p146, %p147
      %p149 = scmp.le.s32.totalorder 1, %s10
      %p150 = scmp.lt.s32.totalorder %s10, 7
      %p151 = pnand %p149, %p150
      %p152 = pneg %p151
      // Predicated region
      $region9: #{baseline_tagger_forward.1} parent=5 // pred_check
        _
      $region10: #{baseline_tagger_forward.1} parent=5 // pred_check_branch
        %154 = sbr.rel (%p151) target = $region12
      $region11: #{baseline_tagger_forward.1} parent=5 // pred_region
        %s155 = ssub.s32 %s10, 1
        // Predicated region
        $region13: #{baseline_tagger_forward.1} parent=11 // pred_check
          %p156 = pneg %p71
        $region14: #{baseline_tagger_forward.1} parent=11 // pred_check_branch
          %158 = sbr.rel (%p156) target = $region16
        $region15: #{baseline_tagger_forward.1} parent=11 // pred_region
          _
        $region16: #{baseline_tagger_forward.1} parent=11 // pred_fallthru
          _
        // Predicated region
        $region17: #{baseline_tagger_forward.1} parent=11 // pred_check
          %p159 = pneg %p92
        $region18: #{baseline_tagger_forward.1} parent=11 // pred_check_branch
          %161 = sbr.rel (%p159) target = $region20
        $region19: #{baseline_tagger_forward.1} parent=11 // pred_region
          _
        $region20: #{baseline_tagger_forward.1} parent=11 // pred_fallthru
          _
        // Predicated region
        $region21: #{baseline_tagger_forward.1} parent=11 // pred_check
          %p162 = pneg %p113
        $region22: #{baseline_tagger_forward.1} parent=11 // pred_check_branch
          %164 = sbr.rel (%p162) target = $region24
        $region23: #{baseline_tagger_forward.1} parent=11 // pred_region
          _
        $region24: #{baseline_tagger_forward.1} parent=11 // pred_fallthru
          _
      $region12: #{baseline_tagger_forward.1} parent=5 // pred_fallthru
        _
      %p165 = scmp.lt.s32.totalorder %s10, 6
      // Predicated region
      $region25: #{baseline_tagger_forward.1} parent=5 // pred_check
        %p166 = pneg %p165
      $region26: #{baseline_tagger_forward.1} parent=5 // pred_check_branch
        %168 = sbr.rel (%p166) target = $region28
      $region27: #{baseline_tagger_forward.1} parent=5 // pred_region
        // Predicated region
        $region29: #{baseline_tagger_forward.1} parent=27 // pred_check
          %p169 = pneg %p44
        $region30: #{baseline_tagger_forward.1} parent=27 // pred_check_branch
          %171 = sbr.rel (%p169) target = $region32
        $region31: #{baseline_tagger_forward.1} parent=27 // pred_region
          %s172 = sand.u32 %s34, 1
          %s173 = sand.u32 %s34, 1
          %s174 = smul.addr %s173, 64
          %s175 = scalar_lea.vmem [#allocation5], %s174
          %s176 = smul.u32 8, %s18
          %s177 = smul.addr %s176, 2
          %s178 = sadd.s32 %s17, %s177
          %s179 = smul.addr %s178, 8
          %s180 = scalar_lea.vmem %s0, %s179
          // Predicated region
          $region33: #{baseline_tagger_forward.1} parent=31 // pred_check
            _
          $region34: #{baseline_tagger_forward.1} parent=31 // pred_check_branch
            %182 = sbr.rel (0) target = $region36
          $region35: #{baseline_tagger_forward.1} parent=31 // pred_region
            // Predicated region
            $region37: #{baseline_tagger_forward.1} parent=35 // pred_check
              _
            $region38: #{baseline_tagger_forward.1} parent=35 // pred_check_branch
              %184 = sbr.rel (0) target = $region40
            $region39: #{baseline_tagger_forward.1} parent=35 // pred_region
              // Predicated region
              $region52: #{baseline_tagger_forward.1} parent=39 // pred_check
                _
              $region53: #{baseline_tagger_forward.1} parent=39 // pred_check_branch
                %214 = sbr.rel (0) target = $region55
              $region54: #{baseline_tagger_forward.1} parent=39 // pred_region
                loop: start=0, step=1, limit=1
                $region56: #{baseline_tagger_forward.1} parent=54 // loop_pre_header
                  _
                $region57: #{baseline_tagger_forward.1} parent=54 // loop_header
                  %s216 = sphi 0, %s220
                  %p217 = scmp.ge.s32.totalorder %s216, 1
                  %s221 = sphi %s180, %s180
                  %s222 = sphi %s175, %s175
                $region58: #{baseline_tagger_forward.1} parent=54 // loop_header_branch
                  %219 = sbr.rel (%p217) target = $region62
                $region59: #{baseline_tagger_forward.1} parent=54 // loop_body
                  %v223 = vld [vmem:[%s221] sm:$0xff]
                  %224 = vst [vmem:[%s222] sm:$0xff] %v223
                  %v225 = vld [vmem:[%s221 + $0x10] sm:$0xff]
                  %226 = vst [vmem:[%s222 + $0x8] sm:$0xff] %v225
                  %v227 = vld [vmem:[%s221 + $0x20] sm:$0xff]
                  %228 = vst [vmem:[%s222 + $0x10] sm:$0xff] %v227
                  %v229 = vld [vmem:[%s221 + $0x30] sm:$0xff]
                  %230 = vst [vmem:[%s222 + $0x18] sm:$0xff] %v229
                  %v231 = vld [vmem:[%s221 + $0x40] sm:$0xff]
                  %232 = vst [vmem:[%s222 + $0x20] sm:$0xff] %v231
                  %v233 = vld [vmem:[%s221 + $0x50] sm:$0xff]
                  %234 = vst [vmem:[%s222 + $0x28] sm:$0xff] %v233
                  %v235 = vld [vmem:[%s221 + $0x60] sm:$0xff]
                  %236 = vst [vmem:[%s222 + $0x30] sm:$0xff] %v235
                  %v237 = vld [vmem:[%s221 + $0x70] sm:$0xff]
                  %238 = vst [vmem:[%s222 + $0x38] sm:$0xff] %v237
                $region60: #{baseline_tagger_forward.1} parent=54 // loop_footer
                  %s220 = sadd.s32 1, %s216
                $region61: #{baseline_tagger_forward.1} parent=54 // loop_footer_branch
                  %215 = sbr.rel target = $region57
                $region62: #{baseline_tagger_forward.1} parent=54 // loop_exit
                  _
              $region55: #{baseline_tagger_forward.1} parent=39 // pred_fallthru
                _
              // Predicated region
              $region63: #{baseline_tagger_forward.1} parent=39 // pred_check
                _
              $region64: #{baseline_tagger_forward.1} parent=39 // pred_check_branch
                %240 = sbr.rel target = $region66
              $region65: #{baseline_tagger_forward.1} parent=39 // pred_region
                _
              $region66: #{baseline_tagger_forward.1} parent=39 // pred_fallthru
                _
            $region40: #{baseline_tagger_forward.1} parent=35 // pred_fallthru
              _
            // Predicated region
            $region41: #{baseline_tagger_forward.1} parent=35 // pred_check
              _
            $region42: #{baseline_tagger_forward.1} parent=35 // pred_check_branch
              %186 = sbr.rel target = $region44
            $region43: #{baseline_tagger_forward.1} parent=35 // pred_region
              %s188 = ssub.s32 256, 1
              loop: start=0, step=1, limit=1
              $region45: #{baseline_tagger_forward.1} parent=43 // loop_pre_header
                _
              $region46: #{baseline_tagger_forward.1} parent=43 // loop_header
                %s190 = sphi 0, %s194
                %p191 = scmp.ge.s32.totalorder %s190, 1
                %s195 = sphi %s180, %s180
                %s196 = sphi %s175, %s175
              $region47: #{baseline_tagger_forward.1} parent=43 // loop_header_branch
                %193 = sbr.rel (%p191) target = $region51
              $region48: #{baseline_tagger_forward.1} parent=43 // loop_body
                %v197 = vld [vmem:[%s195] sm:%s188]
                %198 = vst [vmem:[%s196] sm:%s188] %v197
                %v199 = vld [vmem:[%s195 + $0x10] sm:%s188]
                %200 = vst [vmem:[%s196 + $0x8] sm:%s188] %v199
                %v201 = vld [vmem:[%s195 + $0x20] sm:%s188]
                %202 = vst [vmem:[%s196 + $0x10] sm:%s188] %v201
                %v203 = vld [vmem:[%s195 + $0x30] sm:%s188]
                %204 = vst [vmem:[%s196 + $0x18] sm:%s188] %v203
                %v205 = vld [vmem:[%s195 + $0x40] sm:%s188]
                %206 = vst [vmem:[%s196 + $0x20] sm:%s188] %v205
                %v207 = vld [vmem:[%s195 + $0x50] sm:%s188]
                %208 = vst [vmem:[%s196 + $0x28] sm:%s188] %v207
                %v209 = vld [vmem:[%s195 + $0x60] sm:%s188]
                %210 = vst [vmem:[%s196 + $0x30] sm:%s188] %v209
                %v211 = vld [vmem:[%s195 + $0x70] sm:%s188]
                %212 = vst [vmem:[%s196 + $0x38] sm:%s188] %v211
              $region49: #{baseline_tagger_forward.1} parent=43 // loop_footer
                %s194 = sadd.s32 1, %s190
              $region50: #{baseline_tagger_forward.1} parent=43 // loop_footer_branch
                %189 = sbr.rel target = $region46
              $region51: #{baseline_tagger_forward.1} parent=43 // loop_exit
                _
            $region44: #{baseline_tagger_forward.1} parent=35 // pred_fallthru
              _
          $region36: #{baseline_tagger_forward.1} parent=31 // pred_fallthru
            _
          %241 = vnop
        $region32: #{baseline_tagger_forward.1} parent=27 // pred_fallthru
          _
      $region28: #{baseline_tagger_forward.1} parent=5 // pred_fallthru
        _
      %p242 = scmp.le.s32.totalorder 1, %s10
      %p243 = scmp.lt.s32.totalorder %s10, 7
      %p244 = pnand %p242, %p243
      %p245 = pneg %p244
      // Predicated region
      $region67: #{baseline_tagger_forward.1} parent=5 // pred_check
        _
      $region68: #{baseline_tagger_forward.1} parent=5 // pred_check_branch
        %247 = sbr.rel (%p244) target = $region70
      $region69: #{baseline_tagger_forward.1} parent=5 // pred_region
        %s248 = ssub.s32 %s10, 1
        %s249 = sand.u32 %s37, 1
        %s250 = sand.u32 %s37, 1
        %s251 = smul.addr %s250, 64
        %s252 = scalar_lea.vmem [#allocation5], %s251
        // Predicated region
        $region71: #{baseline_tagger_forward.1} parent=69 // pred_check
          %p253 = pneg %p50
        $region72: #{baseline_tagger_forward.1} parent=69 // pred_check_branch
          %255 = sbr.rel (%p253) target = $region74
        $region73: #{baseline_tagger_forward.1} parent=69 // pred_region
          _
        $region74: #{baseline_tagger_forward.1} parent=69 // pred_fallthru
          _
        %s256 = sand.u32 %s37, 1
        %s257 = sand.u32 %s37, 1
        %s258 = smul.addr %s257, 64
        %s259 = scalar_lea.vmem [#allocation5], %s258
        %p260 = pneg %p50
        %p261 = pneg %p47
        %p262 = pneg %p71
        %p263 = pneg %p68
        %p264 = pneg %p92
        %p265 = pneg %p89
        %p266 = pneg %p113
        %p267 = pneg %p110
        %p268 = pneg %p141
        %p269 = pneg %p138
        %s270 = sand.u32 %s128, 1
        %s271 = sand.u32 %s128, 1
        %s272 = smul.addr %s271, 64
        %s273 = scalar_lea.vmem [#allocation6], %s272
        %s274 = smul.u32 8, %s20
        %s275 = smul.u32 8, %s20
        %p276 = scmp.eq.s32.totalorder %s20, 0
        // Predicated region
        $region75: #{baseline_tagger_forward.1} parent=69 // pred_check
          %p277 = pneg %p276
        $region76: #{baseline_tagger_forward.1} parent=69 // pred_check_branch
          %279 = sbr.rel (%p277) target = $region78
        $region77: #{baseline_tagger_forward.1} parent=69 // pred_region
          %280 = vst [vmem:[#allocation3] sm:$0xff] 0.0
          %281 = vst [vmem:[#allocation4] sm:$0xff] 0.0
        $region78: #{baseline_tagger_forward.1} parent=69 // pred_fallthru
          _
        %v282 = vld [vmem:[%s1] sm:$0xff]
        %v283 = vld [vmem:[%s1 + $0x8] sm:$0xff]
        %v284 = vld [vmem:[%s1 + $0x10] sm:$0xff]
        %v285 = vld [vmem:[%s1 + $0x18] sm:$0xff]
        %v286 = vld [vmem:[%s1 + $0x20] sm:$0xff]
        %v287 = vld [vmem:[%s1 + $0x28] sm:$0xff]
        %v288 = vld [vmem:[%s1 + $0x30] sm:$0xff]
        %v289 = vld [vmem:[%s1 + $0x38] sm:$0xff]
        %v290 = vld [vmem:[%s1 + $0x40] sm:$0xff]
        %v291 = vld [vmem:[%s1 + $0x48] sm:$0xff]
        %v292 = vld [vmem:[%s1 + $0x50] sm:$0xff]
        %v293 = vld [vmem:[%s1 + $0x58] sm:$0xff]
        %v294 = vld [vmem:[%s1 + $0x60] sm:$0xff]
        %v295 = vld [vmem:[%s1 + $0x68] sm:$0xff]
        %v296 = vld [vmem:[%s1 + $0x70] sm:$0xff]
        %v297 = vld [vmem:[%s1 + $0x78] sm:$0xff]
        %v298 = vld [vmem:[%s2] sm:$0xff]
        %v299 = vld [vmem:[%s2 + $0x8] sm:$0xff]
        %v300 = vld [vmem:[%s2 + $0x10] sm:$0xff]
        %v301 = vld [vmem:[%s2 + $0x18] sm:$0xff]
        %v302 = vld [vmem:[%s2 + $0x20] sm:$0xff]
        %v303 = vld [vmem:[%s2 + $0x28] sm:$0xff]
        %v304 = vld [vmem:[%s2 + $0x30] sm:$0xff]
        %v305 = vld [vmem:[%s2 + $0x38] sm:$0xff]
        %v306 = vld [vmem:[%s2 + $0x40] sm:$0xff]
        %v307 = vld [vmem:[%s2 + $0x48] sm:$0xff]
        %v308 = vld [vmem:[%s2 + $0x50] sm:$0xff]
        %v309 = vld [vmem:[%s2 + $0x58] sm:$0xff]
        %v310 = vld [vmem:[%s2 + $0x60] sm:$0xff]
        %v311 = vld [vmem:[%s2 + $0x68] sm:$0xff]
        %v312 = vld [vmem:[%s2 + $0x70] sm:$0xff]
        %v313 = vld [vmem:[%s2 + $0x78] sm:$0xff]
        %v314 = vld [vmem:[%s2 + $0x80] sm:$0xff]
        %v315 = vld [vmem:[%s2 + $0x88] sm:$0xff]
        %v316 = vld [vmem:[%s2 + $0x90] sm:$0xff]
        %v317 = vld [vmem:[%s2 + $0x98] sm:$0xff]
        %v318 = vld [vmem:[%s2 + $0xa0] sm:$0xff]
        %v319 = vld [vmem:[%s2 + $0xa8] sm:$0xff]
        %v320 = vld [vmem:[%s2 + $0xb0] sm:$0xff]
        %v321 = vld [vmem:[%s2 + $0xb8] sm:$0xff]
        %v322 = vld [vmem:[%s2 + $0xc0] sm:$0xff]
        %v323 = vld [vmem:[%s2 + $0xc8] sm:$0xff]
        %v324 = vld [vmem:[%s2 + $0xd0] sm:$0xff]
        %v325 = vld [vmem:[%s2 + $0xd8] sm:$0xff]
        %v326 = vld [vmem:[%s2 + $0xe0] sm:$0xff]
        %v327 = vld [vmem:[%s2 + $0xe8] sm:$0xff]
        %v328 = vld [vmem:[%s2 + $0xf0] sm:$0xff]
        %v329 = vld [vmem:[%s2 + $0xf8] sm:$0xff]
        %v330 = vld [vmem:[%s2 + $0x100] sm:$0xff]
        %v331 = vld [vmem:[%s2 + $0x108] sm:$0xff]
        %v332 = vld [vmem:[%s2 + $0x110] sm:$0xff]
        %v333 = vld [vmem:[%s2 + $0x118] sm:$0xff]
        %v334 = vld [vmem:[%s2 + $0x120] sm:$0xff]
        %v335 = vld [vmem:[%s2 + $0x128] sm:$0xff]
        %v336 = vld [vmem:[%s2 + $0x130] sm:$0xff]
        %v337 = vld [vmem:[%s2 + $0x138] sm:$0xff]
        %v338 = vld [vmem:[%s2 + $0x140] sm:$0xff]
        %v339 = vld [vmem:[%s2 + $0x148] sm:$0xff]
        %v340 = vld [vmem:[%s2 + $0x150] sm:$0xff]
        %v341 = vld [vmem:[%s2 + $0x158] sm:$0xff]
        %v342 = vld [vmem:[%s2 + $0x160] sm:$0xff]
        %v343 = vld [vmem:[%s2 + $0x168] sm:$0xff]
        %v344 = vld [vmem:[%s2 + $0x170] sm:$0xff]
        %v345 = vld [vmem:[%s2 + $0x178] sm:$0xff]
        %v346 = vld [vmem:[%s2 + $0x180] sm:$0xff]
        %v347 = vld [vmem:[%s2 + $0x188] sm:$0xff]
        %v348 = vld [vmem:[%s2 + $0x190] sm:$0xff]
        %v349 = vld [vmem:[%s2 + $0x198] sm:$0xff]
        %v350 = vld [vmem:[%s2 + $0x1a0] sm:$0xff]
        %v351 = vld [vmem:[%s2 + $0x1a8] sm:$0xff]
        %v352 = vld [vmem:[%s2 + $0x1b0] sm:$0xff]
        %v353 = vld [vmem:[%s2 + $0x1b8] sm:$0xff]
        %v354 = vld [vmem:[%s2 + $0x1c0] sm:$0xff]
        %v355 = vld [vmem:[%s2 + $0x1c8] sm:$0xff]
        %v356 = vld [vmem:[%s2 + $0x1d0] sm:$0xff]
        %v357 = vld [vmem:[%s2 + $0x1d8] sm:$0xff]
        %v358 = vld [vmem:[%s2 + $0x1e0] sm:$0xff]
        %v359 = vld [vmem:[%s2 + $0x1e8] sm:$0xff]
        %v360 = vld [vmem:[%s2 + $0x1f0] sm:$0xff]
        %v361 = vld [vmem:[%s2 + $0x1f8] sm:$0xff]
        %v362 = vld [vmem:[%s3] sm:$0xf]
        %v363 = vld [vmem:[%s252] sm:$0xff]
        %v364 = vld [vmem:[%s252 + $0x8] sm:$0xff]
        %v365 = vld [vmem:[%s252 + $0x10] sm:$0xff]
        %v366 = vld [vmem:[%s252 + $0x18] sm:$0xff]
        %v367 = vld [vmem:[%s252 + $0x20] sm:$0xff]
        %v368 = vld [vmem:[%s252 + $0x28] sm:$0xff]
        %v369 = vld [vmem:[%s252 + $0x30] sm:$0xff]
        %v370 = vld [vmem:[%s252 + $0x38] sm:$0xff]
        %v372 = vlaneseq
        %v373 = vshrl.u32 %v372, 7
        %v374 = vsub.s32 0, %v373
        %v375 = vrot.slane %v362, %v374
        %v376 = vlaneseq
        %v377 = vshrl.u32 %v376, 7
        %v378 = vsub.s32 1, %v377
        %v379 = vrot.slane %v362, %v378
        %v380 = vlaneseq
        %v381 = vshrl.u32 %v380, 7
        %v382 = vsub.s32 2, %v381
        %v383 = vrot.slane %v362, %v382
        %v384 = vlaneseq
        %v385 = vshrl.u32 %v384, 7
        %v386 = vsub.s32 3, %v385
        %v387 = vrot.slane %v362, %v386
        %vm392 = vcmask 261120
        %v394 = vsel %vm392, %v363, 0
        %v397 = vsel %vm392, %v364, 0
        %v400 = vsel %vm392, %v365, 0
        %v403 = vsel %vm392, %v366, 0
        %v406 = vsel %vm392, %v367, 0
        %v409 = vsel %vm392, %v368, 0
        %v412 = vsel %vm392, %v369, 0
        %v415 = vsel %vm392, %v370, 0
        %417 = vmatprep.subr.mxu0 0.0
        %418 = vmatpush1.msra.mxu0 0.0
        %419 = vmatprep.subr.mxu0 0.0
        %420 = vmatpush1.msra.mxu0 0.0
        %421 = vmatprep.subr.mxu0 0.0
        %422 = vmatpush1.msra.mxu0 0.0
        %423 = vmatprep.subr.mxu0 0.0
        %424 = vmatpush1.msra.mxu0 0.0
        %425 = vmatprep.subr.mxu0 0.0
        %426 = vmatpush1.msra.mxu0 0.0
        %427 = vmatprep.subr.mxu0 0.0
        %428 = vmatpush1.msra.mxu0 0.0
        %429 = vmatprep.subr.mxu0 0.0
        %430 = vmatpush1.msra.mxu0 0.0
        %431 = vmatprep.subr.mxu0 0.0
        %432 = vmatpush1.msra.mxu0 0.0
        %433 = vmatprep.subr.mxu0 0.0
        %434 = vmatpush1.msra.mxu0 0.0
        %435 = vmatprep.subr.mxu0 0.0
        %436 = vmatpush1.msra.mxu0 0.0
        %437 = vmatprep.subr.mxu0 0.0
        %438 = vmatpush1.msra.mxu0 0.0
        %439 = vmatprep.subr.mxu0 0.0
        %440 = vmatpush1.msra.mxu0 0.0
        %441 = vmatprep.subr.mxu0 %v295
        %442 = vmatpush1.msra.mxu0 %v294
        %443 = vmatprep.subr.mxu0 %v291
        %444 = vmatpush1.msra.mxu0 %v290
        %445 = vmatprep.subr.mxu0 %v287
        %446 = vmatpush1.msra.mxu0 %v286
        %447 = vmatprep.subr.mxu0 %v283
        %448 = vmatpush1.msra.mxu0 %v282
        %449 = vmatprep.subr.mxu0 0.0
        %450 = vmatpush2.msra.mxu0 0.0
        %451 = vmatprep.subr.mxu0 0.0
        %452 = vmatpush2.msra.mxu0 0.0
        %453 = vmatprep.subr.mxu0 0.0
        %454 = vmatpush2.msra.mxu0 0.0
        %455 = vmatprep.subr.mxu0 0.0
        %456 = vmatpush2.msra.mxu0 0.0
        %457 = vmatprep.subr.mxu0 0.0
        %458 = vmatpush2.msra.mxu0 0.0
        %459 = vmatprep.subr.mxu0 0.0
        %460 = vmatpush2.msra.mxu0 0.0
        %461 = vmatprep.subr.mxu0 0.0
        %462 = vmatpush2.msra.mxu0 0.0
        %463 = vmatprep.subr.mxu0 0.0
        %464 = vmatpush2.msra.mxu0 0.0
        %465 = vmatprep.subr.mxu0 0.0
        %466 = vmatpush2.msra.mxu0 0.0
        %467 = vmatprep.subr.mxu0 0.0
        %468 = vmatpush2.msra.mxu0 0.0
        %469 = vmatprep.subr.mxu0 0.0
        %470 = vmatpush2.msra.mxu0 0.0
        %471 = vmatprep.subr.mxu0 0.0
        %472 = vmatpush2.msra.mxu0 0.0
        %473 = vmatprep.subr.mxu0 0.0
        %474 = vmatpush2.msra.mxu0 0.0
        %475 = vmatprep.subr.mxu0 0.0
        %476 = vmatpush2.msra.mxu0 0.0
        %477 = vmatprep.subr.mxu0 0.0
        %478 = vmatpush2.msra.mxu0 0.0
        %479 = vmatprep.subr.mxu0 0.0
        %480 = vmatpush2.msra.mxu0 0.0
        %481 = vmatprep.mubr.f32.mxu0 0.0
        %482 = vmatmul.mubr.f32.gmra.mxu0 %v394
        %v483 = vpop.f32.mrf.mxu0
        %v484 = vadd.f32 %v375, %v483
        %v485 = vpop.f32.mrf.mxu0
        %v486 = vadd.f32 %v379, %v485
        %487 = vmatprep.mubr.f32.mxu0 0.0
        %488 = vmatmul.mubr.f32.gmra.mxu0 %v397
        %v489 = vpop.f32.mrf.mxu0
        %v490 = vadd.f32 %v375, %v489
        %v491 = vpop.f32.mrf.mxu0
        %v492 = vadd.f32 %v379, %v491
        %493 = vmatprep.mubr.f32.mxu0 0.0
        %494 = vmatmul.mubr.f32.gmra.mxu0 %v400
        %v495 = vpop.f32.mrf.mxu0
        %v496 = vadd.f32 %v375, %v495
        %v497 = vpop.f32.mrf.mxu0
        %v498 = vadd.f32 %v379, %v497
        %499 = vmatprep.mubr.f32.mxu0 0.0
        %500 = vmatmul.mubr.f32.gmra.mxu0 %v403
        %v501 = vpop.f32.mrf.mxu0
        %v502 = vadd.f32 %v375, %v501
        %v503 = vpop.f32.mrf.mxu0
        %v504 = vadd.f32 %v379, %v503
        %505 = vmatprep.mubr.f32.mxu0 0.0
        %506 = vmatmul.mubr.f32.gmra.mxu0 %v406
        %v507 = vpop.f32.mrf.mxu0
        %v508 = vadd.f32 %v375, %v507
        %v509 = vpop.f32.mrf.mxu0
        %v510 = vadd.f32 %v379, %v509
        %511 = vmatprep.mubr.f32.mxu0 0.0
        %512 = vmatmul.mubr.f32.gmra.mxu0 %v409
        %v513 = vpop.f32.mrf.mxu0
        %v514 = vadd.f32 %v375, %v513
        %v515 = vpop.f32.mrf.mxu0
        %v516 = vadd.f32 %v379, %v515
        %517 = vmatprep.mubr.f32.mxu0 0.0
        %518 = vmatmul.mubr.f32.gmra.mxu0 %v412
        %v519 = vpop.f32.mrf.mxu0
        %v520 = vadd.f32 %v375, %v519
        %v521 = vpop.f32.mrf.mxu0
        %v522 = vadd.f32 %v379, %v521
        %523 = vmatprep.mubr.f32.mxu0 0.0
        %524 = vmatmul.mubr.f32.gmra.mxu0 %v415
        %v525 = vpop.f32.mrf.mxu0
        %v526 = vadd.f32 %v375, %v525
        %v527 = vpop.f32.mrf.mxu0
        %v528 = vadd.f32 %v379, %v527
        %529 = vdwg.mxu0
        %530 = vmatprep.subr.mxu0 0.0
        %531 = vmatpush1.msra.mxu0 0.0
        %532 = vmatprep.subr.mxu0 0.0
        %533 = vmatpush1.msra.mxu0 0.0
        %534 = vmatprep.subr.mxu0 0.0
        %535 = vmatpush1.msra.mxu0 0.0
        %536 = vmatprep.subr.mxu0 0.0
        %537 = vmatpush1.msra.mxu0 0.0
        %538 = vmatprep.subr.mxu0 0.0
        %539 = vmatpush1.msra.mxu0 0.0
        %540 = vmatprep.subr.mxu0 0.0
        %541 = vmatpush1.msra.mxu0 0.0
        %542 = vmatprep.subr.mxu0 0.0
        %543 = vmatpush1.msra.mxu0 0.0
        %544 = vmatprep.subr.mxu0 0.0
        %545 = vmatpush1.msra.mxu0 0.0
        %546 = vmatprep.subr.mxu0 0.0
        %547 = vmatpush1.msra.mxu0 0.0
        %548 = vmatprep.subr.mxu0 0.0
        %549 = vmatpush1.msra.mxu0 0.0
        %550 = vmatprep.subr.mxu0 0.0
        %551 = vmatpush1.msra.mxu0 0.0
        %552 = vmatprep.subr.mxu0 0.0
        %553 = vmatpush1.msra.mxu0 0.0
        %554 = vmatprep.subr.mxu0 %v297
        %555 = vmatpush1.msra.mxu0 %v296
        %556 = vmatprep.subr.mxu0 %v293
        %557 = vmatpush1.msra.mxu0 %v292
        %558 = vmatprep.subr.mxu0 %v289
        %559 = vmatpush1.msra.mxu0 %v288
        %560 = vmatprep.subr.mxu0 %v285
        %561 = vmatpush1.msra.mxu0 %v284
        %562 = vmatprep.subr.mxu0 0.0
        %563 = vmatpush2.msra.mxu0 0.0
        %564 = vmatprep.subr.mxu0 0.0
        %565 = vmatpush2.msra.mxu0 0.0
        %566 = vmatprep.subr.mxu0 0.0
        %567 = vmatpush2.msra.mxu0 0.0
        %568 = vmatprep.subr.mxu0 0.0
        %569 = vmatpush2.msra.mxu0 0.0
        %570 = vmatprep.subr.mxu0 0.0
        %571 = vmatpush2.msra.mxu0 0.0
        %572 = vmatprep.subr.mxu0 0.0
        %573 = vmatpush2.msra.mxu0 0.0
        %574 = vmatprep.subr.mxu0 0.0
        %575 = vmatpush2.msra.mxu0 0.0
        %576 = vmatprep.subr.mxu0 0.0
        %577 = vmatpush2.msra.mxu0 0.0
        %578 = vmatprep.subr.mxu0 0.0
        %579 = vmatpush2.msra.mxu0 0.0
        %580 = vmatprep.subr.mxu0 0.0
        %581 = vmatpush2.msra.mxu0 0.0
        %582 = vmatprep.subr.mxu0 0.0
        %583 = vmatpush2.msra.mxu0 0.0
        %584 = vmatprep.subr.mxu0 0.0
        %585 = vmatpush2.msra.mxu0 0.0
        %586 = vmatprep.subr.mxu0 0.0
        %587 = vmatpush2.msra.mxu0 0.0
        %588 = vmatprep.subr.mxu0 0.0
        %589 = vmatpush2.msra.mxu0 0.0
        %590 = vmatprep.subr.mxu0 0.0
        %591 = vmatpush2.msra.mxu0 0.0
        %592 = vmatprep.subr.mxu0 0.0
        %593 = vmatpush2.msra.mxu0 0.0
        %594 = vmatprep.mubr.f32.mxu0 0.0
        %595 = vmatmul.mubr.f32.gmra.mxu0 %v394
        %v596 = vpop.f32.mrf.mxu0
        %v597 = vadd.f32 %v383, %v596
        %v598 = vpop.f32.mrf.mxu0
        %v599 = vadd.f32 %v387, %v598
        %600 = vmatprep.mubr.f32.mxu0 0.0
        %601 = vmatmul.mubr.f32.gmra.mxu0 %v397
        %v602 = vpop.f32.mrf.mxu0
        %v603 = vadd.f32 %v383, %v602
        %v604 = vpop.f32.mrf.mxu0
        %v605 = vadd.f32 %v387, %v604
        %606 = vmatprep.mubr.f32.mxu0 0.0
        %607 = vmatmul.mubr.f32.gmra.mxu0 %v400
        %v608 = vpop.f32.mrf.mxu0
        %v609 = vadd.f32 %v383, %v608
        %v610 = vpop.f32.mrf.mxu0
        %v611 = vadd.f32 %v387, %v610
        %612 = vmatprep.mubr.f32.mxu0 0.0
        %613 = vmatmul.mubr.f32.gmra.mxu0 %v403
        %v614 = vpop.f32.mrf.mxu0
        %v615 = vadd.f32 %v383, %v614
        %v616 = vpop.f32.mrf.mxu0
        %v617 = vadd.f32 %v387, %v616
        %618 = vmatprep.mubr.f32.mxu0 0.0
        %619 = vmatmul.mubr.f32.gmra.mxu0 %v406
        %v620 = vpop.f32.mrf.mxu0
        %v621 = vadd.f32 %v383, %v620
        %v622 = vpop.f32.mrf.mxu0
        %v623 = vadd.f32 %v387, %v622
        %624 = vmatprep.mubr.f32.mxu0 0.0
        %625 = vmatmul.mubr.f32.gmra.mxu0 %v409
        %v626 = vpop.f32.mrf.mxu0
        %v627 = vadd.f32 %v383, %v626
        %v628 = vpop.f32.mrf.mxu0
        %v629 = vadd.f32 %v387, %v628
        %630 = vmatprep.mubr.f32.mxu0 0.0
        %631 = vmatmul.mubr.f32.gmra.mxu0 %v412
        %v632 = vpop.f32.mrf.mxu0
        %v633 = vadd.f32 %v383, %v632
        %v634 = vpop.f32.mrf.mxu0
        %v635 = vadd.f32 %v387, %v634
        %636 = vmatprep.mubr.f32.mxu0 0.0
        %637 = vmatmul.mubr.f32.gmra.mxu0 %v415
        %v638 = vpop.f32.mrf.mxu0
        %v639 = vadd.f32 %v383, %v638
        %v640 = vpop.f32.mrf.mxu0
        %v641 = vadd.f32 %v387, %v640
        %642 = vdwg.mxu0
        %643 = vst [vmem:[#allocation2] sm:$0xff] %v484
        %644 = vst [vmem:[#allocation2 + $0x8] sm:$0xff] %v486
        %645 = vst [vmem:[#allocation2 + $0x10] sm:$0xff] %v597
        %646 = vst [vmem:[#allocation2 + $0x18] sm:$0xff] %v599
        %647 = vst [vmem:[#allocation2 + $0x20] sm:$0xff] %v490
        %648 = vst [vmem:[#allocation2 + $0x28] sm:$0xff] %v492
        %649 = vst [vmem:[#allocation2 + $0x30] sm:$0xff] %v603
        %650 = vst [vmem:[#allocation2 + $0x38] sm:$0xff] %v605
        %651 = vst [vmem:[#allocation2 + $0x40] sm:$0xff] %v496
        %652 = vst [vmem:[#allocation2 + $0x48] sm:$0xff] %v498
        %653 = vst [vmem:[#allocation2 + $0x50] sm:$0xff] %v609
        %654 = vst [vmem:[#allocation2 + $0x58] sm:$0xff] %v611
        %655 = vst [vmem:[#allocation2 + $0x60] sm:$0xff] %v502
        %656 = vst [vmem:[#allocation2 + $0x68] sm:$0xff] %v504
        %657 = vst [vmem:[#allocation2 + $0x70] sm:$0xff] %v615
        %658 = vst [vmem:[#allocation2 + $0x78] sm:$0xff] %v617
        %659 = vst [vmem:[#allocation2 + $0x80] sm:$0xff] %v508
        %660 = vst [vmem:[#allocation2 + $0x88] sm:$0xff] %v510
        %661 = vst [vmem:[#allocation2 + $0x90] sm:$0xff] %v621
        %662 = vst [vmem:[#allocation2 + $0x98] sm:$0xff] %v623
        %663 = vst [vmem:[#allocation2 + $0xa0] sm:$0xff] %v514
        %664 = vst [vmem:[#allocation2 + $0xa8] sm:$0xff] %v516
        %665 = vst [vmem:[#allocation2 + $0xb0] sm:$0xff] %v627
        %666 = vst [vmem:[#allocation2 + $0xb8] sm:$0xff] %v629
        %667 = vst [vmem:[#allocation2 + $0xc0] sm:$0xff] %v520
        %668 = vst [vmem:[#allocation2 + $0xc8] sm:$0xff] %v522
        %669 = vst [vmem:[#allocation2 + $0xd0] sm:$0xff] %v633
        %670 = vst [vmem:[#allocation2 + $0xd8] sm:$0xff] %v635
        %671 = vst [vmem:[#allocation2 + $0xe0] sm:$0xff] %v526
        %672 = vst [vmem:[#allocation2 + $0xe8] sm:$0xff] %v528
        %673 = vst [vmem:[#allocation2 + $0xf0] sm:$0xff] %v639
        %674 = vst [vmem:[#allocation2 + $0xf8] sm:$0xff] %v641
        %v675 = vld [vmem:[#allocation3] sm:$0xff]
        %v676 = vld [vmem:[#allocation4] sm:$0xff]
        %s677 = smul.u32 0, 4
        %s678 = smul.addr %s677, 8
        %s679 = scalar_lea.vmem [#allocation2], %s678
        %v680 = vld [vmem:[%s679] sm:$0xff]
        %v681 = vld [vmem:[%s679 + $0x8] sm:$0xff]
        %v682 = vld [vmem:[%s679 + $0x10] sm:$0xff]
        %v683 = vld [vmem:[%s679 + $0x18] sm:$0xff]
        %684 = vmatprep.subr.mxu0 %v359
        %685 = vmatpush1.msra.mxu0 %v358
        %686 = vmatprep.subr.mxu0 %v355
        %687 = vmatpush1.msra.mxu0 %v354
        %688 = vmatprep.subr.mxu0 %v351
        %689 = vmatpush1.msra.mxu0 %v350
        %690 = vmatprep.subr.mxu0 %v347
        %691 = vmatpush1.msra.mxu0 %v346
        %692 = vmatprep.subr.mxu0 %v343
        %693 = vmatpush1.msra.mxu0 %v342
        %694 = vmatprep.subr.mxu0 %v339
        %695 = vmatpush1.msra.mxu0 %v338
        %696 = vmatprep.subr.mxu0 %v335
        %697 = vmatpush1.msra.mxu0 %v334
        %698 = vmatprep.subr.mxu0 %v331
        %699 = vmatpush1.msra.mxu0 %v330
        %700 = vmatprep.subr.mxu0 %v327
        %701 = vmatpush1.msra.mxu0 %v326
        %702 = vmatprep.subr.mxu0 %v323
        %703 = vmatpush1.msra.mxu0 %v322
        %704 = vmatprep.subr.mxu0 %v319
        %705 = vmatpush1.msra.mxu0 %v318
        %706 = vmatprep.subr.mxu0 %v315
        %707 = vmatpush1.msra.mxu0 %v314
        %708 = vmatprep.subr.mxu0 %v311
        %709 = vmatpush1.msra.mxu0 %v310
        %710 = vmatprep.subr.mxu0 %v307
        %711 = vmatpush1.msra.mxu0 %v306
        %712 = vmatprep.subr.mxu0 %v303
        %713 = vmatpush1.msra.mxu0 %v302
        %714 = vmatprep.subr.mxu0 %v299
        %715 = vmatpush1.msra.mxu0 %v298
        %716 = vmatprep.subr.mxu0 0.0
        %717 = vmatpush2.msra.mxu0 0.0
        %718 = vmatprep.subr.mxu0 0.0
        %719 = vmatpush2.msra.mxu0 0.0
        %720 = vmatprep.subr.mxu0 0.0
        %721 = vmatpush2.msra.mxu0 0.0
        %722 = vmatprep.subr.mxu0 0.0
        %723 = vmatpush2.msra.mxu0 0.0
        %724 = vmatprep.subr.mxu0 0.0
        %725 = vmatpush2.msra.mxu0 0.0
        %726 = vmatprep.subr.mxu0 0.0
        %727 = vmatpush2.msra.mxu0 0.0
        %728 = vmatprep.subr.mxu0 0.0
        %729 = vmatpush2.msra.mxu0 0.0
        %730 = vmatprep.subr.mxu0 0.0
        %731 = vmatpush2.msra.mxu0 0.0
        %732 = vmatprep.subr.mxu0 0.0
        %733 = vmatpush2.msra.mxu0 0.0
        %734 = vmatprep.subr.mxu0 0.0
        %735 = vmatpush2.msra.mxu0 0.0
        %736 = vmatprep.subr.mxu0 0.0
        %737 = vmatpush2.msra.mxu0 0.0
        %738 = vmatprep.subr.mxu0 0.0
        %739 = vmatpush2.msra.mxu0 0.0
        %740 = vmatprep.subr.mxu0 0.0
        %741 = vmatpush2.msra.mxu0 0.0
        %742 = vmatprep.subr.mxu0 0.0
        %743 = vmatpush2.msra.mxu0 0.0
        %744 = vmatprep.subr.mxu0 0.0
        %745 = vmatpush2.msra.mxu0 0.0
        %746 = vmatprep.subr.mxu0 0.0
        %747 = vmatpush2.msra.mxu0 0.0
        %748 = vmatprep.mubr.f32.mxu0 0.0
        %749 = vmatmul.mubr.f32.gmra.mxu0 %v675
        %v750 = vpop.f32.mrf.mxu0
        %v751 = vadd.f32 0.0, %v750
        %v752 = vpop.f32.mrf.mxu0
        %v753 = vadd.f32 0.0, %v752
        %754 = vdwg.mxu0
        %755 = vmatprep.subr.mxu0 %v361
        %756 = vmatpush1.msra.mxu0 %v360
        %757 = vmatprep.subr.mxu0 %v357
        %758 = vmatpush1.msra.mxu0 %v356
        %759 = vmatprep.subr.mxu0 %v353
        %760 = vmatpush1.msra.mxu0 %v352
        %761 = vmatprep.subr.mxu0 %v349
        %762 = vmatpush1.msra.mxu0 %v348
        %763 = vmatprep.subr.mxu0 %v345
        %764 = vmatpush1.msra.mxu0 %v344
        %765 = vmatprep.subr.mxu0 %v341
        %766 = vmatpush1.msra.mxu0 %v340
        %767 = vmatprep.subr.mxu0 %v337
        %768 = vmatpush1.msra.mxu0 %v336
        %769 = vmatprep.subr.mxu0 %v333
        %770 = vmatpush1.msra.mxu0 %v332
        %771 = vmatprep.subr.mxu0 %v329
        %772 = vmatpush1.msra.mxu0 %v328
        %773 = vmatprep.subr.mxu0 %v325
        %774 = vmatpush1.msra.mxu0 %v324
        %775 = vmatprep.subr.mxu0 %v321
        %776 = vmatpush1.msra.mxu0 %v320
        %777 = vmatprep.subr.mxu0 %v317
        %778 = vmatpush1.msra.mxu0 %v316
        %779 = vmatprep.subr.mxu0 %v313
        %780 = vmatpush1.msra.mxu0 %v312
        %781 = vmatprep.subr.mxu0 %v309
        %782 = vmatpush1.msra.mxu0 %v308
        %783 = vmatprep.subr.mxu0 %v305
        %784 = vmatpush1.msra.mxu0 %v304
        %785 = vmatprep.subr.mxu0 %v301
        %786 = vmatpush1.msra.mxu0 %v300
        %787 = vmatprep.subr.mxu0 0.0
        %788 = vmatpush2.msra.mxu0 0.0
        %789 = vmatprep.subr.mxu0 0.0
        %790 = vmatpush2.msra.mxu0 0.0
        %791 = vmatprep.subr.mxu0 0.0
        %792 = vmatpush2.msra.mxu0 0.0
        %793 = vmatprep.subr.mxu0 0.0
        %794 = vmatpush2.msra.mxu0 0.0
        %795 = vmatprep.subr.mxu0 0.0
        %796 = vmatpush2.msra.mxu0 0.0
        %797 = vmatprep.subr.mxu0 0.0
        %798 = vmatpush2.msra.mxu0 0.0
        %799 = vmatprep.subr.mxu0 0.0
        %800 = vmatpush2.msra.mxu0 0.0
        %801 = vmatprep.subr.mxu0 0.0
        %802 = vmatpush2.msra.mxu0 0.0
        %803 = vmatprep.subr.mxu0 0.0
        %804 = vmatpush2.msra.mxu0 0.0
        %805 = vmatprep.subr.mxu0 0.0
        %806 = vmatpush2.msra.mxu0 0.0
        %807 = vmatprep.subr.mxu0 0.0
        %808 = vmatpush2.msra.mxu0 0.0
        %809 = vmatprep.subr.mxu0 0.0
        %810 = vmatpush2.msra.mxu0 0.0
        %811 = vmatprep.subr.mxu0 0.0
        %812 = vmatpush2.msra.mxu0 0.0
        %813 = vmatprep.subr.mxu0 0.0
        %814 = vmatpush2.msra.mxu0 0.0
        %815 = vmatprep.subr.mxu0 0.0
        %816 = vmatpush2.msra.mxu0 0.0
        %817 = vmatprep.subr.mxu0 0.0
        %818 = vmatpush2.msra.mxu0 0.0
        %819 = vmatprep.mubr.f32.mxu0 0.0
        %820 = vmatmul.mubr.f32.gmra.mxu0 %v675
        %v821 = vpop.f32.mrf.mxu0
        %v822 = vadd.f32 0.0, %v821
        %v823 = vpop.f32.mrf.mxu0
        %v824 = vadd.f32 0.0, %v823
        %825 = vdwg.mxu0
        %v826 = vadd.f32 %v680, %v751
        %v827 = vadd.f32 %v681, %v753
        %v828 = vadd.f32 %v682, %v822
        %v829 = vadd.f32 %v683, %v824
        %v830 = vtanh.pop %v826
        %v831 = vtanh.pop %v827
        %v832 = vtanh.pop %v828
        %v833 = vtanh.pop %v829
        %v834 = vmul.f32 %v830, 0.5
        %v835 = vadd.f32 %v834, 0.5
        %v836 = vmul.f32 %v831, 0.5
        %v837 = vadd.f32 %v836, 0.5
        %v838 = vmul.f32 %v833, 0.5
        %v839 = vadd.f32 %v838, 0.5
        %v840 = vmul.f32 %v837, %v676
        %v841 = vmul.f32 %v835, %v832
        %v842 = vadd.f32 %v840, %v841
        %v843 = vtanh.pop %v842
        %v844 = vmul.f32 %v839, %v843
        %845 = vst [vmem:[%s273] sm:$0xff] %v844
        %s846 = smul.u32 1, 4
        %s847 = smul.addr %s846, 8
        %s848 = scalar_lea.vmem [#allocation2], %s847
        %v849 = vld [vmem:[%s848] sm:$0xff]
        %v850 = vld [vmem:[%s848 + $0x8] sm:$0xff]
        %v851 = vld [vmem:[%s848 + $0x10] sm:$0xff]
        %v852 = vld [vmem:[%s848 + $0x18] sm:$0xff]
        %853 = vmatprep.subr.mxu0 %v359
        %854 = vmatpush1.msra.mxu0 %v358
        %855 = vmatprep.subr.mxu0 %v355
        %856 = vmatpush1.msra.mxu0 %v354
        %857 = vmatprep.subr.mxu0 %v351
        %858 = vmatpush1.msra.mxu0 %v350
        %859 = vmatprep.subr.mxu0 %v347
        %860 = vmatpush1.msra.mxu0 %v346
        %861 = vmatprep.subr.mxu0 %v343
        %862 = vmatpush1.msra.mxu0 %v342
        %863 = vmatprep.subr.mxu0 %v339
        %864 = vmatpush1.msra.mxu0 %v338
        %865 = vmatprep.subr.mxu0 %v335
        %866 = vmatpush1.msra.mxu0 %v334
        %867 = vmatprep.subr.mxu0 %v331
        %868 = vmatpush1.msra.mxu0 %v330
        %869 = vmatprep.subr.mxu0 %v327
        %870 = vmatpush1.msra.mxu0 %v326
        %871 = vmatprep.subr.mxu0 %v323
        %872 = vmatpush1.msra.mxu0 %v322
        %873 = vmatprep.subr.mxu0 %v319
        %874 = vmatpush1.msra.mxu0 %v318
        %875 = vmatprep.subr.mxu0 %v315
        %876 = vmatpush1.msra.mxu0 %v314
        %877 = vmatprep.subr.mxu0 %v311
        %878 = vmatpush1.msra.mxu0 %v310
        %879 = vmatprep.subr.mxu0 %v307
        %880 = vmatpush1.msra.mxu0 %v306
        %881 = vmatprep.subr.mxu0 %v303
        %882 = vmatpush1.msra.mxu0 %v302
        %883 = vmatprep.subr.mxu0 %v299
        %884 = vmatpush1.msra.mxu0 %v298
        %885 = vmatprep.subr.mxu0 0.0
        %886 = vmatpush2.msra.mxu0 0.0
        %887 = vmatprep.subr.mxu0 0.0
        %888 = vmatpush2.msra.mxu0 0.0
        %889 = vmatprep.subr.mxu0 0.0
        %890 = vmatpush2.msra.mxu0 0.0
        %891 = vmatprep.subr.mxu0 0.0
        %892 = vmatpush2.msra.mxu0 0.0
        %893 = vmatprep.subr.mxu0 0.0
        %894 = vmatpush2.msra.mxu0 0.0
        %895 = vmatprep.subr.mxu0 0.0
        %896 = vmatpush2.msra.mxu0 0.0
        %897 = vmatprep.subr.mxu0 0.0
        %898 = vmatpush2.msra.mxu0 0.0
        %899 = vmatprep.subr.mxu0 0.0
        %900 = vmatpush2.msra.mxu0 0.0
        %901 = vmatprep.subr.mxu0 0.0
        %902 = vmatpush2.msra.mxu0 0.0
        %903 = vmatprep.subr.mxu0 0.0
        %904 = vmatpush2.msra.mxu0 0.0
        %905 = vmatprep.subr.mxu0 0.0
        %906 = vmatpush2.msra.mxu0 0.0
        %907 = vmatprep.subr.mxu0 0.0
        %908 = vmatpush2.msra.mxu0 0.0
        %909 = vmatprep.subr.mxu0 0.0
        %910 = vmatpush2.msra.mxu0 0.0
        %911 = vmatprep.subr.mxu0 0.0
        %912 = vmatpush2.msra.mxu0 0.0
        %913 = vmatprep.subr.mxu0 0.0
        %914 = vmatpush2.msra.mxu0 0.0
        %915 = vmatprep.subr.mxu0 0.0
        %916 = vmatpush2.msra.mxu0 0.0
        %917 = vmatprep.mubr.f32.mxu0 0.0
        %918 = vmatmul.mubr.f32.gmra.mxu0 %v844
        %v919 = vpop.f32.mrf.mxu0
        %v920 = vadd.f32 0.0, %v919
        %v921 = vpop.f32.mrf.mxu0
        %v922 = vadd.f32 0.0, %v921
        %923 = vdwg.mxu0
        %924 = vmatprep.subr.mxu0 %v361
        %925 = vmatpush1.msra.mxu0 %v360
        %926 = vmatprep.subr.mxu0 %v357
        %927 = vmatpush1.msra.mxu0 %v356
        %928 = vmatprep.subr.mxu0 %v353
        %929 = vmatpush1.msra.mxu0 %v352
        %930 = vmatprep.subr.mxu0 %v349
        %931 = vmatpush1.msra.mxu0 %v348
        %932 = vmatprep.subr.mxu0 %v345
        %933 = vmatpush1.msra.mxu0 %v344
        %934 = vmatprep.subr.mxu0 %v341
        %935 = vmatpush1.msra.mxu0 %v340
        %936 = vmatprep.subr.mxu0 %v337
        %937 = vmatpush1.msra.mxu0 %v336
        %938 = vmatprep.subr.mxu0 %v333
        %939 = vmatpush1.msra.mxu0 %v332
        %940 = vmatprep.subr.mxu0 %v329
        %941 = vmatpush1.msra.mxu0 %v328
        %942 = vmatprep.subr.mxu0 %v325
        %943 = vmatpush1.msra.mxu0 %v324
        %944 = vmatprep.subr.mxu0 %v321
        %945 = vmatpush1.msra.mxu0 %v320
        %946 = vmatprep.subr.mxu0 %v317
        %947 = vmatpush1.msra.mxu0 %v316
        %948 = vmatprep.subr.mxu0 %v313
        %949 = vmatpush1.msra.mxu0 %v312
        %950 = vmatprep.subr.mxu0 %v309
        %951 = vmatpush1.msra.mxu0 %v308
        %952 = vmatprep.subr.mxu0 %v305
        %953 = vmatpush1.msra.mxu0 %v304
        %954 = vmatprep.subr.mxu0 %v301
        %955 = vmatpush1.msra.mxu0 %v300
        %956 = vmatprep.subr.mxu0 0.0
        %957 = vmatpush2.msra.mxu0 0.0
        %958 = vmatprep.subr.mxu0 0.0
        %959 = vmatpush2.msra.mxu0 0.0
        %960 = vmatprep.subr.mxu0 0.0
        %961 = vmatpush2.msra.mxu0 0.0
        %962 = vmatprep.subr.mxu0 0.0
        %963 = vmatpush2.msra.mxu0 0.0
        %964 = vmatprep.subr.mxu0 0.0
        %965 = vmatpush2.msra.mxu0 0.0
        %966 = vmatprep.subr.mxu0 0.0
        %967 = vmatpush2.msra.mxu0 0.0
        %968 = vmatprep.subr.mxu0 0.0
        %969 = vmatpush2.msra.mxu0 0.0
        %970 = vmatprep.subr.mxu0 0.0
        %971 = vmatpush2.msra.mxu0 0.0
        %972 = vmatprep.subr.mxu0 0.0
        %973 = vmatpush2.msra.mxu0 0.0
        %974 = vmatprep.subr.mxu0 0.0
        %975 = vmatpush2.msra.mxu0 0.0
        %976 = vmatprep.subr.mxu0 0.0
        %977 = vmatpush2.msra.mxu0 0.0
        %978 = vmatprep.subr.mxu0 0.0
        %979 = vmatpush2.msra.mxu0 0.0
        %980 = vmatprep.subr.mxu0 0.0
        %981 = vmatpush2.msra.mxu0 0.0
        %982 = vmatprep.subr.mxu0 0.0
        %983 = vmatpush2.msra.mxu0 0.0
        %984 = vmatprep.subr.mxu0 0.0
        %985 = vmatpush2.msra.mxu0 0.0
        %986 = vmatprep.subr.mxu0 0.0
        %987 = vmatpush2.msra.mxu0 0.0
        %988 = vmatprep.mubr.f32.mxu0 0.0
        %989 = vmatmul.mubr.f32.gmra.mxu0 %v844
        %v990 = vpop.f32.mrf.mxu0
        %v991 = vadd.f32 0.0, %v990
        %v992 = vpop.f32.mrf.mxu0
        %v993 = vadd.f32 0.0, %v992
        %994 = vdwg.mxu0
        %v995 = vadd.f32 %v849, %v920
        %v996 = vadd.f32 %v850, %v922
        %v997 = vadd.f32 %v851, %v991
        %v998 = vadd.f32 %v852, %v993
        %v999 = vtanh.pop %v995
        %v1000 = vtanh.pop %v996
        %v1001 = vtanh.pop %v997
        %v1002 = vtanh.pop %v998
        %v1003 = vmul.f32 %v999, 0.5
        %v1004 = vadd.f32 %v1003, 0.5
        %v1005 = vmul.f32 %v1000, 0.5
        %v1006 = vadd.f32 %v1005, 0.5
        %v1007 = vmul.f32 %v1002, 0.5
        %v1008 = vadd.f32 %v1007, 0.5
        %v1009 = vmul.f32 %v1006, %v842
        %v1010 = vmul.f32 %v1004, %v1001
        %v1011 = vadd.f32 %v1009, %v1010
        %v1012 = vtanh.pop %v1011
        %v1013 = vmul.f32 %v1008, %v1012
        %s1014 = scalar_lea.vmem %s273, 8 [#allocation6]
        %1015 = vst [vmem:[%s1014] sm:$0xff] %v1013
        %s1016 = smul.u32 2, 4
        %s1017 = smul.addr %s1016, 8
        %s1018 = scalar_lea.vmem [#allocation2], %s1017
        %v1019 = vld [vmem:[%s1018] sm:$0xff]
        %v1020 = vld [vmem:[%s1018 + $0x8] sm:$0xff]
        %v1021 = vld [vmem:[%s1018 + $0x10] sm:$0xff]
        %v1022 = vld [vmem:[%s1018 + $0x18] sm:$0xff]
        %1023 = vmatprep.subr.mxu0 %v359
        %1024 = vmatpush1.msra.mxu0 %v358
        %1025 = vmatprep.subr.mxu0 %v355
        %1026 = vmatpush1.msra.mxu0 %v354
        %1027 = vmatprep.subr.mxu0 %v351
        %1028 = vmatpush1.msra.mxu0 %v350
        %1029 = vmatprep.subr.mxu0 %v347
        %1030 = vmatpush1.msra.mxu0 %v346
        %1031 = vmatprep.subr.mxu0 %v343
        %1032 = vmatpush1.msra.mxu0 %v342
        %1033 = vmatprep.subr.mxu0 %v339
        %1034 = vmatpush1.msra.mxu0 %v338
        %1035 = vmatprep.subr.mxu0 %v335
        %1036 = vmatpush1.msra.mxu0 %v334
        %1037 = vmatprep.subr.mxu0 %v331
        %1038 = vmatpush1.msra.mxu0 %v330
        %1039 = vmatprep.subr.mxu0 %v327
        %1040 = vmatpush1.msra.mxu0 %v326
        %1041 = vmatprep.subr.mxu0 %v323
        %1042 = vmatpush1.msra.mxu0 %v322
        %1043 = vmatprep.subr.mxu0 %v319
        %1044 = vmatpush1.msra.mxu0 %v318
        %1045 = vmatprep.subr.mxu0 %v315
        %1046 = vmatpush1.msra.mxu0 %v314
        %1047 = vmatprep.subr.mxu0 %v311
        %1048 = vmatpush1.msra.mxu0 %v310
        %1049 = vmatprep.subr.mxu0 %v307
        %1050 = vmatpush1.msra.mxu0 %v306
        %1051 = vmatprep.subr.mxu0 %v303
        %1052 = vmatpush1.msra.mxu0 %v302
        %1053 = vmatprep.subr.mxu0 %v299
        %1054 = vmatpush1.msra.mxu0 %v298
        %1055 = vmatprep.subr.mxu0 0.0
        %1056 = vmatpush2.msra.mxu0 0.0
        %1057 = vmatprep.subr.mxu0 0.0
        %1058 = vmatpush2.msra.mxu0 0.0
        %1059 = vmatprep.subr.mxu0 0.0
        %1060 = vmatpush2.msra.mxu0 0.0
        %1061 = vmatprep.subr.mxu0 0.0
        %1062 = vmatpush2.msra.mxu0 0.0
        %1063 = vmatprep.subr.mxu0 0.0
        %1064 = vmatpush2.msra.mxu0 0.0
        %1065 = vmatprep.subr.mxu0 0.0
        %1066 = vmatpush2.msra.mxu0 0.0
        %1067 = vmatprep.subr.mxu0 0.0
        %1068 = vmatpush2.msra.mxu0 0.0
        %1069 = vmatprep.subr.mxu0 0.0
        %1070 = vmatpush2.msra.mxu0 0.0
        %1071 = vmatprep.subr.mxu0 0.0
        %1072 = vmatpush2.msra.mxu0 0.0
        %1073 = vmatprep.subr.mxu0 0.0
        %1074 = vmatpush2.msra.mxu0 0.0
        %1075 = vmatprep.subr.mxu0 0.0
        %1076 = vmatpush2.msra.mxu0 0.0
        %1077 = vmatprep.subr.mxu0 0.0
        %1078 = vmatpush2.msra.mxu0 0.0
        %1079 = vmatprep.subr.mxu0 0.0
        %1080 = vmatpush2.msra.mxu0 0.0
        %1081 = vmatprep.subr.mxu0 0.0
        %1082 = vmatpush2.msra.mxu0 0.0
        %1083 = vmatprep.subr.mxu0 0.0
        %1084 = vmatpush2.msra.mxu0 0.0
        %1085 = vmatprep.subr.mxu0 0.0
        %1086 = vmatpush2.msra.mxu0 0.0
        %1087 = vmatprep.mubr.f32.mxu0 0.0
        %1088 = vmatmul.mubr.f32.gmra.mxu0 %v1013
        %v1089 = vpop.f32.mrf.mxu0
        %v1090 = vadd.f32 0.0, %v1089
        %v1091 = vpop.f32.mrf.mxu0
        %v1092 = vadd.f32 0.0, %v1091
        %1093 = vdwg.mxu0
        %1094 = vmatprep.subr.mxu0 %v361
        %1095 = vmatpush1.msra.mxu0 %v360
        %1096 = vmatprep.subr.mxu0 %v357
        %1097 = vmatpush1.msra.mxu0 %v356
        %1098 = vmatprep.subr.mxu0 %v353
        %1099 = vmatpush1.msra.mxu0 %v352
        %1100 = vmatprep.subr.mxu0 %v349
        %1101 = vmatpush1.msra.mxu0 %v348
        %1102 = vmatprep.subr.mxu0 %v345
        %1103 = vmatpush1.msra.mxu0 %v344
        %1104 = vmatprep.subr.mxu0 %v341
        %1105 = vmatpush1.msra.mxu0 %v340
        %1106 = vmatprep.subr.mxu0 %v337
        %1107 = vmatpush1.msra.mxu0 %v336
        %1108 = vmatprep.subr.mxu0 %v333
        %1109 = vmatpush1.msra.mxu0 %v332
        %1110 = vmatprep.subr.mxu0 %v329
        %1111 = vmatpush1.msra.mxu0 %v328
        %1112 = vmatprep.subr.mxu0 %v325
        %1113 = vmatpush1.msra.mxu0 %v324
        %1114 = vmatprep.subr.mxu0 %v321
        %1115 = vmatpush1.msra.mxu0 %v320
        %1116 = vmatprep.subr.mxu0 %v317
        %1117 = vmatpush1.msra.mxu0 %v316
        %1118 = vmatprep.subr.mxu0 %v313
        %1119 = vmatpush1.msra.mxu0 %v312
        %1120 = vmatprep.subr.mxu0 %v309
        %1121 = vmatpush1.msra.mxu0 %v308
        %1122 = vmatprep.subr.mxu0 %v305
        %1123 = vmatpush1.msra.mxu0 %v304
        %1124 = vmatprep.subr.mxu0 %v301
        %1125 = vmatpush1.msra.mxu0 %v300
        %1126 = vmatprep.subr.mxu0 0.0
        %1127 = vmatpush2.msra.mxu0 0.0
        %1128 = vmatprep.subr.mxu0 0.0
        %1129 = vmatpush2.msra.mxu0 0.0
        %1130 = vmatprep.subr.mxu0 0.0
        %1131 = vmatpush2.msra.mxu0 0.0
        %1132 = vmatprep.subr.mxu0 0.0
        %1133 = vmatpush2.msra.mxu0 0.0
        %1134 = vmatprep.subr.mxu0 0.0
        %1135 = vmatpush2.msra.mxu0 0.0
        %1136 = vmatprep.subr.mxu0 0.0
        %1137 = vmatpush2.msra.mxu0 0.0
        %1138 = vmatprep.subr.mxu0 0.0
        %1139 = vmatpush2.msra.mxu0 0.0
        %1140 = vmatprep.subr.mxu0 0.0
        %1141 = vmatpush2.msra.mxu0 0.0
        %1142 = vmatprep.subr.mxu0 0.0
        %1143 = vmatpush2.msra.mxu0 0.0
        %1144 = vmatprep.subr.mxu0 0.0
        %1145 = vmatpush2.msra.mxu0 0.0
        %1146 = vmatprep.subr.mxu0 0.0
        %1147 = vmatpush2.msra.mxu0 0.0
        %1148 = vmatprep.subr.mxu0 0.0
        %1149 = vmatpush2.msra.mxu0 0.0
        %1150 = vmatprep.subr.mxu0 0.0
        %1151 = vmatpush2.msra.mxu0 0.0
        %1152 = vmatprep.subr.mxu0 0.0
        %1153 = vmatpush2.msra.mxu0 0.0
        %1154 = vmatprep.subr.mxu0 0.0
        %1155 = vmatpush2.msra.mxu0 0.0
        %1156 = vmatprep.subr.mxu0 0.0
        %1157 = vmatpush2.msra.mxu0 0.0
        %1158 = vmatprep.mubr.f32.mxu0 0.0
        %1159 = vmatmul.mubr.f32.gmra.mxu0 %v1013
        %v1160 = vpop.f32.mrf.mxu0
        %v1161 = vadd.f32 0.0, %v1160
        %v1162 = vpop.f32.mrf.mxu0
        %v1163 = vadd.f32 0.0, %v1162
        %1164 = vdwg.mxu0
        %v1165 = vadd.f32 %v1019, %v1090
        %v1166 = vadd.f32 %v1020, %v1092
        %v1167 = vadd.f32 %v1021, %v1161
        %v1168 = vadd.f32 %v1022, %v1163
        %v1169 = vtanh.pop %v1165
        %v1170 = vtanh.pop %v1166
        %v1171 = vtanh.pop %v1167
        %v1172 = vtanh.pop %v1168
        %v1173 = vmul.f32 %v1169, 0.5
        %v1174 = vadd.f32 %v1173, 0.5
        %v1175 = vmul.f32 %v1170, 0.5
        %v1176 = vadd.f32 %v1175, 0.5
        %v1177 = vmul.f32 %v1172, 0.5
        %v1178 = vadd.f32 %v1177, 0.5
        %v1179 = vmul.f32 %v1176, %v1011
        %v1180 = vmul.f32 %v1174, %v1171
        %v1181 = vadd.f32 %v1179, %v1180
        %v1182 = vtanh.pop %v1181
        %v1183 = vmul.f32 %v1178, %v1182
        %s1184 = scalar_lea.vmem %s273, 16 [#allocation6]
        %1185 = vst [vmem:[%s1184] sm:$0xff] %v1183
        %s1186 = smul.u32 3, 4
        %s1187 = smul.addr %s1186, 8
        %s1188 = scalar_lea.vmem [#allocation2], %s1187
        %v1189 = vld [vmem:[%s1188] sm:$0xff]
        %v1190 = vld [vmem:[%s1188 + $0x8] sm:$0xff]
        %v1191 = vld [vmem:[%s1188 + $0x10] sm:$0xff]
        %v1192 = vld [vmem:[%s1188 + $0x18] sm:$0xff]
        %1193 = vmatprep.subr.mxu0 %v359
        %1194 = vmatpush1.msra.mxu0 %v358
        %1195 = vmatprep.subr.mxu0 %v355
        %1196 = vmatpush1.msra.mxu0 %v354
        %1197 = vmatprep.subr.mxu0 %v351
        %1198 = vmatpush1.msra.mxu0 %v350
        %1199 = vmatprep.subr.mxu0 %v347
        %1200 = vmatpush1.msra.mxu0 %v346
        %1201 = vmatprep.subr.mxu0 %v343
        %1202 = vmatpush1.msra.mxu0 %v342
        %1203 = vmatprep.subr.mxu0 %v339
        %1204 = vmatpush1.msra.mxu0 %v338
        %1205 = vmatprep.subr.mxu0 %v335
        %1206 = vmatpush1.msra.mxu0 %v334
        %1207 = vmatprep.subr.mxu0 %v331
        %1208 = vmatpush1.msra.mxu0 %v330
        %1209 = vmatprep.subr.mxu0 %v327
        %1210 = vmatpush1.msra.mxu0 %v326
        %1211 = vmatprep.subr.mxu0 %v323
        %1212 = vmatpush1.msra.mxu0 %v322
        %1213 = vmatprep.subr.mxu0 %v319
        %1214 = vmatpush1.msra.mxu0 %v318
        %1215 = vmatprep.subr.mxu0 %v315
        %1216 = vmatpush1.msra.mxu0 %v314
        %1217 = vmatprep.subr.mxu0 %v311
        %1218 = vmatpush1.msra.mxu0 %v310
        %1219 = vmatprep.subr.mxu0 %v307
        %1220 = vmatpush1.msra.mxu0 %v306
        %1221 = vmatprep.subr.mxu0 %v303
        %1222 = vmatpush1.msra.mxu0 %v302
        %1223 = vmatprep.subr.mxu0 %v299
        %1224 = vmatpush1.msra.mxu0 %v298
        %1225 = vmatprep.subr.mxu0 0.0
        %1226 = vmatpush2.msra.mxu0 0.0
        %1227 = vmatprep.subr.mxu0 0.0
        %1228 = vmatpush2.msra.mxu0 0.0
        %1229 = vmatprep.subr.mxu0 0.0
        %1230 = vmatpush2.msra.mxu0 0.0
        %1231 = vmatprep.subr.mxu0 0.0
        %1232 = vmatpush2.msra.mxu0 0.0
        %1233 = vmatprep.subr.mxu0 0.0
        %1234 = vmatpush2.msra.mxu0 0.0
        %1235 = vmatprep.subr.mxu0 0.0
        %1236 = vmatpush2.msra.mxu0 0.0
        %1237 = vmatprep.subr.mxu0 0.0
        %1238 = vmatpush2.msra.mxu0 0.0
        %1239 = vmatprep.subr.mxu0 0.0
        %1240 = vmatpush2.msra.mxu0 0.0
        %1241 = vmatprep.subr.mxu0 0.0
        %1242 = vmatpush2.msra.mxu0 0.0
        %1243 = vmatprep.subr.mxu0 0.0
        %1244 = vmatpush2.msra.mxu0 0.0
        %1245 = vmatprep.subr.mxu0 0.0
        %1246 = vmatpush2.msra.mxu0 0.0
        %1247 = vmatprep.subr.mxu0 0.0
        %1248 = vmatpush2.msra.mxu0 0.0
        %1249 = vmatprep.subr.mxu0 0.0
        %1250 = vmatpush2.msra.mxu0 0.0
        %1251 = vmatprep.subr.mxu0 0.0
        %1252 = vmatpush2.msra.mxu0 0.0
        %1253 = vmatprep.subr.mxu0 0.0
        %1254 = vmatpush2.msra.mxu0 0.0
        %1255 = vmatprep.subr.mxu0 0.0
        %1256 = vmatpush2.msra.mxu0 0.0
        %1257 = vmatprep.mubr.f32.mxu0 0.0
        %1258 = vmatmul.mubr.f32.gmra.mxu0 %v1183
        %v1259 = vpop.f32.mrf.mxu0
        %v1260 = vadd.f32 0.0, %v1259
        %v1261 = vpop.f32.mrf.mxu0
        %v1262 = vadd.f32 0.0, %v1261
        %1263 = vdwg.mxu0
        %1264 = vmatprep.subr.mxu0 %v361
        %1265 = vmatpush1.msra.mxu0 %v360
        %1266 = vmatprep.subr.mxu0 %v357
        %1267 = vmatpush1.msra.mxu0 %v356
        %1268 = vmatprep.subr.mxu0 %v353
        %1269 = vmatpush1.msra.mxu0 %v352
        %1270 = vmatprep.subr.mxu0 %v349
        %1271 = vmatpush1.msra.mxu0 %v348
        %1272 = vmatprep.subr.mxu0 %v345
        %1273 = vmatpush1.msra.mxu0 %v344
        %1274 = vmatprep.subr.mxu0 %v341
        %1275 = vmatpush1.msra.mxu0 %v340
        %1276 = vmatprep.subr.mxu0 %v337
        %1277 = vmatpush1.msra.mxu0 %v336
        %1278 = vmatprep.subr.mxu0 %v333
        %1279 = vmatpush1.msra.mxu0 %v332
        %1280 = vmatprep.subr.mxu0 %v329
        %1281 = vmatpush1.msra.mxu0 %v328
        %1282 = vmatprep.subr.mxu0 %v325
        %1283 = vmatpush1.msra.mxu0 %v324
        %1284 = vmatprep.subr.mxu0 %v321
        %1285 = vmatpush1.msra.mxu0 %v320
        %1286 = vmatprep.subr.mxu0 %v317
        %1287 = vmatpush1.msra.mxu0 %v316
        %1288 = vmatprep.subr.mxu0 %v313
        %1289 = vmatpush1.msra.mxu0 %v312
        %1290 = vmatprep.subr.mxu0 %v309
        %1291 = vmatpush1.msra.mxu0 %v308
        %1292 = vmatprep.subr.mxu0 %v305
        %1293 = vmatpush1.msra.mxu0 %v304
        %1294 = vmatprep.subr.mxu0 %v301
        %1295 = vmatpush1.msra.mxu0 %v300
        %1296 = vmatprep.subr.mxu0 0.0
        %1297 = vmatpush2.msra.mxu0 0.0
        %1298 = vmatprep.subr.mxu0 0.0
        %1299 = vmatpush2.msra.mxu0 0.0
        %1300 = vmatprep.subr.mxu0 0.0
        %1301 = vmatpush2.msra.mxu0 0.0
        %1302 = vmatprep.subr.mxu0 0.0
        %1303 = vmatpush2.msra.mxu0 0.0
        %1304 = vmatprep.subr.mxu0 0.0
        %1305 = vmatpush2.msra.mxu0 0.0
        %1306 = vmatprep.subr.mxu0 0.0
        %1307 = vmatpush2.msra.mxu0 0.0
        %1308 = vmatprep.subr.mxu0 0.0
        %1309 = vmatpush2.msra.mxu0 0.0
        %1310 = vmatprep.subr.mxu0 0.0
        %1311 = vmatpush2.msra.mxu0 0.0
        %1312 = vmatprep.subr.mxu0 0.0
        %1313 = vmatpush2.msra.mxu0 0.0
        %1314 = vmatprep.subr.mxu0 0.0
        %1315 = vmatpush2.msra.mxu0 0.0
        %1316 = vmatprep.subr.mxu0 0.0
        %1317 = vmatpush2.msra.mxu0 0.0
        %1318 = vmatprep.subr.mxu0 0.0
        %1319 = vmatpush2.msra.mxu0 0.0
        %1320 = vmatprep.subr.mxu0 0.0
        %1321 = vmatpush2.msra.mxu0 0.0
        %1322 = vmatprep.subr.mxu0 0.0
        %1323 = vmatpush2.msra.mxu0 0.0
        %1324 = vmatprep.subr.mxu0 0.0
        %1325 = vmatpush2.msra.mxu0 0.0
        %1326 = vmatprep.subr.mxu0 0.0
        %1327 = vmatpush2.msra.mxu0 0.0
        %1328 = vmatprep.mubr.f32.mxu0 0.0
        %1329 = vmatmul.mubr.f32.gmra.mxu0 %v1183
        %v1330 = vpop.f32.mrf.mxu0
        %v1331 = vadd.f32 0.0, %v1330
        %v1332 = vpop.f32.mrf.mxu0
        %v1333 = vadd.f32 0.0, %v1332
        %1334 = vdwg.mxu0
        %v1335 = vadd.f32 %v1189, %v1260
        %v1336 = vadd.f32 %v1190, %v1262
        %v1337 = vadd.f32 %v1191, %v1331
        %v1338 = vadd.f32 %v1192, %v1333
        %v1339 = vtanh.pop %v1335
        %v1340 = vtanh.pop %v1336
        %v1341 = vtanh.pop %v1337
        %v1342 = vtanh.pop %v1338
        %v1343 = vmul.f32 %v1339, 0.5
        %v1344 = vadd.f32 %v1343, 0.5
        %v1345 = vmul.f32 %v1340, 0.5
        %v1346 = vadd.f32 %v1345, 0.5
        %v1347 = vmul.f32 %v1342, 0.5
        %v1348 = vadd.f32 %v1347, 0.5
        %v1349 = vmul.f32 %v1346, %v1181
        %v1350 = vmul.f32 %v1344, %v1341
        %v1351 = vadd.f32 %v1349, %v1350
        %v1352 = vtanh.pop %v1351
        %v1353 = vmul.f32 %v1348, %v1352
        %s1354 = scalar_lea.vmem %s273, 24 [#allocation6]
        %1355 = vst [vmem:[%s1354] sm:$0xff] %v1353
        %s1356 = smul.u32 4, 4
        %s1357 = smul.addr %s1356, 8
        %s1358 = scalar_lea.vmem [#allocation2], %s1357
        %v1359 = vld [vmem:[%s1358] sm:$0xff]
        %v1360 = vld [vmem:[%s1358 + $0x8] sm:$0xff]
        %v1361 = vld [vmem:[%s1358 + $0x10] sm:$0xff]
        %v1362 = vld [vmem:[%s1358 + $0x18] sm:$0xff]
        %1363 = vmatprep.subr.mxu0 %v359
        %1364 = vmatpush1.msra.mxu0 %v358
        %1365 = vmatprep.subr.mxu0 %v355
        %1366 = vmatpush1.msra.mxu0 %v354
        %1367 = vmatprep.subr.mxu0 %v351
        %1368 = vmatpush1.msra.mxu0 %v350
        %1369 = vmatprep.subr.mxu0 %v347
        %1370 = vmatpush1.msra.mxu0 %v346
        %1371 = vmatprep.subr.mxu0 %v343
        %1372 = vmatpush1.msra.mxu0 %v342
        %1373 = vmatprep.subr.mxu0 %v339
        %1374 = vmatpush1.msra.mxu0 %v338
        %1375 = vmatprep.subr.mxu0 %v335
        %1376 = vmatpush1.msra.mxu0 %v334
        %1377 = vmatprep.subr.mxu0 %v331
        %1378 = vmatpush1.msra.mxu0 %v330
        %1379 = vmatprep.subr.mxu0 %v327
        %1380 = vmatpush1.msra.mxu0 %v326
        %1381 = vmatprep.subr.mxu0 %v323
        %1382 = vmatpush1.msra.mxu0 %v322
        %1383 = vmatprep.subr.mxu0 %v319
        %1384 = vmatpush1.msra.mxu0 %v318
        %1385 = vmatprep.subr.mxu0 %v315
        %1386 = vmatpush1.msra.mxu0 %v314
        %1387 = vmatprep.subr.mxu0 %v311
        %1388 = vmatpush1.msra.mxu0 %v310
        %1389 = vmatprep.subr.mxu0 %v307
        %1390 = vmatpush1.msra.mxu0 %v306
        %1391 = vmatprep.subr.mxu0 %v303
        %1392 = vmatpush1.msra.mxu0 %v302
        %1393 = vmatprep.subr.mxu0 %v299
        %1394 = vmatpush1.msra.mxu0 %v298
        %1395 = vmatprep.subr.mxu0 0.0
        %1396 = vmatpush2.msra.mxu0 0.0
        %1397 = vmatprep.subr.mxu0 0.0
        %1398 = vmatpush2.msra.mxu0 0.0
        %1399 = vmatprep.subr.mxu0 0.0
        %1400 = vmatpush2.msra.mxu0 0.0
        %1401 = vmatprep.subr.mxu0 0.0
        %1402 = vmatpush2.msra.mxu0 0.0
        %1403 = vmatprep.subr.mxu0 0.0
        %1404 = vmatpush2.msra.mxu0 0.0
        %1405 = vmatprep.subr.mxu0 0.0
        %1406 = vmatpush2.msra.mxu0 0.0
        %1407 = vmatprep.subr.mxu0 0.0
        %1408 = vmatpush2.msra.mxu0 0.0
        %1409 = vmatprep.subr.mxu0 0.0
        %1410 = vmatpush2.msra.mxu0 0.0
        %1411 = vmatprep.subr.mxu0 0.0
        %1412 = vmatpush2.msra.mxu0 0.0
        %1413 = vmatprep.subr.mxu0 0.0
        %1414 = vmatpush2.msra.mxu0 0.0
        %1415 = vmatprep.subr.mxu0 0.0
        %1416 = vmatpush2.msra.mxu0 0.0
        %1417 = vmatprep.subr.mxu0 0.0
        %1418 = vmatpush2.msra.mxu0 0.0
        %1419 = vmatprep.subr.mxu0 0.0
        %1420 = vmatpush2.msra.mxu0 0.0
        %1421 = vmatprep.subr.mxu0 0.0
        %1422 = vmatpush2.msra.mxu0 0.0
        %1423 = vmatprep.subr.mxu0 0.0
        %1424 = vmatpush2.msra.mxu0 0.0
        %1425 = vmatprep.subr.mxu0 0.0
        %1426 = vmatpush2.msra.mxu0 0.0
        %1427 = vmatprep.mubr.f32.mxu0 0.0
        %1428 = vmatmul.mubr.f32.gmra.mxu0 %v1353
        %v1429 = vpop.f32.mrf.mxu0
        %v1430 = vadd.f32 0.0, %v1429
        %v1431 = vpop.f32.mrf.mxu0
        %v1432 = vadd.f32 0.0, %v1431
        %1433 = vdwg.mxu0
        %1434 = vmatprep.subr.mxu0 %v361
        %1435 = vmatpush1.msra.mxu0 %v360
        %1436 = vmatprep.subr.mxu0 %v357
        %1437 = vmatpush1.msra.mxu0 %v356
        %1438 = vmatprep.subr.mxu0 %v353
        %1439 = vmatpush1.msra.mxu0 %v352
        %1440 = vmatprep.subr.mxu0 %v349
        %1441 = vmatpush1.msra.mxu0 %v348
        %1442 = vmatprep.subr.mxu0 %v345
        %1443 = vmatpush1.msra.mxu0 %v344
        %1444 = vmatprep.subr.mxu0 %v341
        %1445 = vmatpush1.msra.mxu0 %v340
        %1446 = vmatprep.subr.mxu0 %v337
        %1447 = vmatpush1.msra.mxu0 %v336
        %1448 = vmatprep.subr.mxu0 %v333
        %1449 = vmatpush1.msra.mxu0 %v332
        %1450 = vmatprep.subr.mxu0 %v329
        %1451 = vmatpush1.msra.mxu0 %v328
        %1452 = vmatprep.subr.mxu0 %v325
        %1453 = vmatpush1.msra.mxu0 %v324
        %1454 = vmatprep.subr.mxu0 %v321
        %1455 = vmatpush1.msra.mxu0 %v320
        %1456 = vmatprep.subr.mxu0 %v317
        %1457 = vmatpush1.msra.mxu0 %v316
        %1458 = vmatprep.subr.mxu0 %v313
        %1459 = vmatpush1.msra.mxu0 %v312
        %1460 = vmatprep.subr.mxu0 %v309
        %1461 = vmatpush1.msra.mxu0 %v308
        %1462 = vmatprep.subr.mxu0 %v305
        %1463 = vmatpush1.msra.mxu0 %v304
        %1464 = vmatprep.subr.mxu0 %v301
        %1465 = vmatpush1.msra.mxu0 %v300
        %1466 = vmatprep.subr.mxu0 0.0
        %1467 = vmatpush2.msra.mxu0 0.0
        %1468 = vmatprep.subr.mxu0 0.0
        %1469 = vmatpush2.msra.mxu0 0.0
        %1470 = vmatprep.subr.mxu0 0.0
        %1471 = vmatpush2.msra.mxu0 0.0
        %1472 = vmatprep.subr.mxu0 0.0
        %1473 = vmatpush2.msra.mxu0 0.0
        %1474 = vmatprep.subr.mxu0 0.0
        %1475 = vmatpush2.msra.mxu0 0.0
        %1476 = vmatprep.subr.mxu0 0.0
        %1477 = vmatpush2.msra.mxu0 0.0
        %1478 = vmatprep.subr.mxu0 0.0
        %1479 = vmatpush2.msra.mxu0 0.0
        %1480 = vmatprep.subr.mxu0 0.0
        %1481 = vmatpush2.msra.mxu0 0.0
        %1482 = vmatprep.subr.mxu0 0.0
        %1483 = vmatpush2.msra.mxu0 0.0
        %1484 = vmatprep.subr.mxu0 0.0
        %1485 = vmatpush2.msra.mxu0 0.0
        %1486 = vmatprep.subr.mxu0 0.0
        %1487 = vmatpush2.msra.mxu0 0.0
        %1488 = vmatprep.subr.mxu0 0.0
        %1489 = vmatpush2.msra.mxu0 0.0
        %1490 = vmatprep.subr.mxu0 0.0
        %1491 = vmatpush2.msra.mxu0 0.0
        %1492 = vmatprep.subr.mxu0 0.0
        %1493 = vmatpush2.msra.mxu0 0.0
        %1494 = vmatprep.subr.mxu0 0.0
        %1495 = vmatpush2.msra.mxu0 0.0
        %1496 = vmatprep.subr.mxu0 0.0
        %1497 = vmatpush2.msra.mxu0 0.0
        %1498 = vmatprep.mubr.f32.mxu0 0.0
        %1499 = vmatmul.mubr.f32.gmra.mxu0 %v1353
        %v1500 = vpop.f32.mrf.mxu0
        %v1501 = vadd.f32 0.0, %v1500
        %v1502 = vpop.f32.mrf.mxu0
        %v1503 = vadd.f32 0.0, %v1502
        %1504 = vdwg.mxu0
        %v1505 = vadd.f32 %v1359, %v1430
        %v1506 = vadd.f32 %v1360, %v1432
        %v1507 = vadd.f32 %v1361, %v1501
        %v1508 = vadd.f32 %v1362, %v1503
        %v1509 = vtanh.pop %v1505
        %v1510 = vtanh.pop %v1506
        %v1511 = vtanh.pop %v1507
        %v1512 = vtanh.pop %v1508
        %v1513 = vmul.f32 %v1509, 0.5
        %v1514 = vadd.f32 %v1513, 0.5
        %v1515 = vmul.f32 %v1510, 0.5
        %v1516 = vadd.f32 %v1515, 0.5
        %v1517 = vmul.f32 %v1512, 0.5
        %v1518 = vadd.f32 %v1517, 0.5
        %v1519 = vmul.f32 %v1516, %v1351
        %v1520 = vmul.f32 %v1514, %v1511
        %v1521 = vadd.f32 %v1519, %v1520
        %v1522 = vtanh.pop %v1521
        %v1523 = vmul.f32 %v1518, %v1522
        %s1524 = scalar_lea.vmem %s273, 32 [#allocation6]
        %1525 = vst [vmem:[%s1524] sm:$0xff] %v1523
        %s1526 = smul.u32 5, 4
        %s1527 = smul.addr %s1526, 8
        %s1528 = scalar_lea.vmem [#allocation2], %s1527
        %v1529 = vld [vmem:[%s1528] sm:$0xff]
        %v1530 = vld [vmem:[%s1528 + $0x8] sm:$0xff]
        %v1531 = vld [vmem:[%s1528 + $0x10] sm:$0xff]
        %v1532 = vld [vmem:[%s1528 + $0x18] sm:$0xff]
        %1533 = vmatprep.subr.mxu0 %v359
        %1534 = vmatpush1.msra.mxu0 %v358
        %1535 = vmatprep.subr.mxu0 %v355
        %1536 = vmatpush1.msra.mxu0 %v354
        %1537 = vmatprep.subr.mxu0 %v351
        %1538 = vmatpush1.msra.mxu0 %v350
        %1539 = vmatprep.subr.mxu0 %v347
        %1540 = vmatpush1.msra.mxu0 %v346
        %1541 = vmatprep.subr.mxu0 %v343
        %1542 = vmatpush1.msra.mxu0 %v342
        %1543 = vmatprep.subr.mxu0 %v339
        %1544 = vmatpush1.msra.mxu0 %v338
        %1545 = vmatprep.subr.mxu0 %v335
        %1546 = vmatpush1.msra.mxu0 %v334
        %1547 = vmatprep.subr.mxu0 %v331
        %1548 = vmatpush1.msra.mxu0 %v330
        %1549 = vmatprep.subr.mxu0 %v327
        %1550 = vmatpush1.msra.mxu0 %v326
        %1551 = vmatprep.subr.mxu0 %v323
        %1552 = vmatpush1.msra.mxu0 %v322
        %1553 = vmatprep.subr.mxu0 %v319
        %1554 = vmatpush1.msra.mxu0 %v318
        %1555 = vmatprep.subr.mxu0 %v315
        %1556 = vmatpush1.msra.mxu0 %v314
        %1557 = vmatprep.subr.mxu0 %v311
        %1558 = vmatpush1.msra.mxu0 %v310
        %1559 = vmatprep.subr.mxu0 %v307
        %1560 = vmatpush1.msra.mxu0 %v306
        %1561 = vmatprep.subr.mxu0 %v303
        %1562 = vmatpush1.msra.mxu0 %v302
        %1563 = vmatprep.subr.mxu0 %v299
        %1564 = vmatpush1.msra.mxu0 %v298
        %1565 = vmatprep.subr.mxu0 0.0
        %1566 = vmatpush2.msra.mxu0 0.0
        %1567 = vmatprep.subr.mxu0 0.0
        %1568 = vmatpush2.msra.mxu0 0.0
        %1569 = vmatprep.subr.mxu0 0.0
        %1570 = vmatpush2.msra.mxu0 0.0
        %1571 = vmatprep.subr.mxu0 0.0
        %1572 = vmatpush2.msra.mxu0 0.0
        %1573 = vmatprep.subr.mxu0 0.0
        %1574 = vmatpush2.msra.mxu0 0.0
        %1575 = vmatprep.subr.mxu0 0.0
        %1576 = vmatpush2.msra.mxu0 0.0
        %1577 = vmatprep.subr.mxu0 0.0
        %1578 = vmatpush2.msra.mxu0 0.0
        %1579 = vmatprep.subr.mxu0 0.0
        %1580 = vmatpush2.msra.mxu0 0.0
        %1581 = vmatprep.subr.mxu0 0.0
        %1582 = vmatpush2.msra.mxu0 0.0
        %1583 = vmatprep.subr.mxu0 0.0
        %1584 = vmatpush2.msra.mxu0 0.0
        %1585 = vmatprep.subr.mxu0 0.0
        %1586 = vmatpush2.msra.mxu0 0.0
        %1587 = vmatprep.subr.mxu0 0.0
        %1588 = vmatpush2.msra.mxu0 0.0
        %1589 = vmatprep.subr.mxu0 0.0
        %1590 = vmatpush2.msra.mxu0 0.0
        %1591 = vmatprep.subr.mxu0 0.0
        %1592 = vmatpush2.msra.mxu0 0.0
        %1593 = vmatprep.subr.mxu0 0.0
        %1594 = vmatpush2.msra.mxu0 0.0
        %1595 = vmatprep.subr.mxu0 0.0
        %1596 = vmatpush2.msra.mxu0 0.0
        %1597 = vmatprep.mubr.f32.mxu0 0.0
        %1598 = vmatmul.mubr.f32.gmra.mxu0 %v1523
        %v1599 = vpop.f32.mrf.mxu0
        %v1600 = vadd.f32 0.0, %v1599
        %v1601 = vpop.f32.mrf.mxu0
        %v1602 = vadd.f32 0.0, %v1601
        %1603 = vdwg.mxu0
        %1604 = vmatprep.subr.mxu0 %v361
        %1605 = vmatpush1.msra.mxu0 %v360
        %1606 = vmatprep.subr.mxu0 %v357
        %1607 = vmatpush1.msra.mxu0 %v356
        %1608 = vmatprep.subr.mxu0 %v353
        %1609 = vmatpush1.msra.mxu0 %v352
        %1610 = vmatprep.subr.mxu0 %v349
        %1611 = vmatpush1.msra.mxu0 %v348
        %1612 = vmatprep.subr.mxu0 %v345
        %1613 = vmatpush1.msra.mxu0 %v344
        %1614 = vmatprep.subr.mxu0 %v341
        %1615 = vmatpush1.msra.mxu0 %v340
        %1616 = vmatprep.subr.mxu0 %v337
        %1617 = vmatpush1.msra.mxu0 %v336
        %1618 = vmatprep.subr.mxu0 %v333
        %1619 = vmatpush1.msra.mxu0 %v332
        %1620 = vmatprep.subr.mxu0 %v329
        %1621 = vmatpush1.msra.mxu0 %v328
        %1622 = vmatprep.subr.mxu0 %v325
        %1623 = vmatpush1.msra.mxu0 %v324
        %1624 = vmatprep.subr.mxu0 %v321
        %1625 = vmatpush1.msra.mxu0 %v320
        %1626 = vmatprep.subr.mxu0 %v317
        %1627 = vmatpush1.msra.mxu0 %v316
        %1628 = vmatprep.subr.mxu0 %v313
        %1629 = vmatpush1.msra.mxu0 %v312
        %1630 = vmatprep.subr.mxu0 %v309
        %1631 = vmatpush1.msra.mxu0 %v308
        %1632 = vmatprep.subr.mxu0 %v305
        %1633 = vmatpush1.msra.mxu0 %v304
        %1634 = vmatprep.subr.mxu0 %v301
        %1635 = vmatpush1.msra.mxu0 %v300
        %1636 = vmatprep.subr.mxu0 0.0
        %1637 = vmatpush2.msra.mxu0 0.0
        %1638 = vmatprep.subr.mxu0 0.0
        %1639 = vmatpush2.msra.mxu0 0.0
        %1640 = vmatprep.subr.mxu0 0.0
        %1641 = vmatpush2.msra.mxu0 0.0
        %1642 = vmatprep.subr.mxu0 0.0
        %1643 = vmatpush2.msra.mxu0 0.0
        %1644 = vmatprep.subr.mxu0 0.0
        %1645 = vmatpush2.msra.mxu0 0.0
        %1646 = vmatprep.subr.mxu0 0.0
        %1647 = vmatpush2.msra.mxu0 0.0
        %1648 = vmatprep.subr.mxu0 0.0
        %1649 = vmatpush2.msra.mxu0 0.0
        %1650 = vmatprep.subr.mxu0 0.0
        %1651 = vmatpush2.msra.mxu0 0.0
        %1652 = vmatprep.subr.mxu0 0.0
        %1653 = vmatpush2.msra.mxu0 0.0
        %1654 = vmatprep.subr.mxu0 0.0
        %1655 = vmatpush2.msra.mxu0 0.0
        %1656 = vmatprep.subr.mxu0 0.0
        %1657 = vmatpush2.msra.mxu0 0.0
        %1658 = vmatprep.subr.mxu0 0.0
        %1659 = vmatpush2.msra.mxu0 0.0
        %1660 = vmatprep.subr.mxu0 0.0
        %1661 = vmatpush2.msra.mxu0 0.0
        %1662 = vmatprep.subr.mxu0 0.0
        %1663 = vmatpush2.msra.mxu0 0.0
        %1664 = vmatprep.subr.mxu0 0.0
        %1665 = vmatpush2.msra.mxu0 0.0
        %1666 = vmatprep.subr.mxu0 0.0
        %1667 = vmatpush2.msra.mxu0 0.0
        %1668 = vmatprep.mubr.f32.mxu0 0.0
        %1669 = vmatmul.mubr.f32.gmra.mxu0 %v1523
        %v1670 = vpop.f32.mrf.mxu0
        %v1671 = vadd.f32 0.0, %v1670
        %v1672 = vpop.f32.mrf.mxu0
        %v1673 = vadd.f32 0.0, %v1672
        %1674 = vdwg.mxu0
        %v1675 = vadd.f32 %v1529, %v1600
        %v1676 = vadd.f32 %v1530, %v1602
        %v1677 = vadd.f32 %v1531, %v1671
        %v1678 = vadd.f32 %v1532, %v1673
        %v1679 = vtanh.pop %v1675
        %v1680 = vtanh.pop %v1676
        %v1681 = vtanh.pop %v1677
        %v1682 = vtanh.pop %v1678
        %v1683 = vmul.f32 %v1679, 0.5
        %v1684 = vadd.f32 %v1683, 0.5
        %v1685 = vmul.f32 %v1680, 0.5
        %v1686 = vadd.f32 %v1685, 0.5
        %v1687 = vmul.f32 %v1682, 0.5
        %v1688 = vadd.f32 %v1687, 0.5
        %v1689 = vmul.f32 %v1686, %v1521
        %v1690 = vmul.f32 %v1684, %v1681
        %v1691 = vadd.f32 %v1689, %v1690
        %v1692 = vtanh.pop %v1691
        %v1693 = vmul.f32 %v1688, %v1692
        %s1694 = scalar_lea.vmem %s273, 40 [#allocation6]
        %1695 = vst [vmem:[%s1694] sm:$0xff] %v1693
        %s1696 = smul.u32 6, 4
        %s1697 = smul.addr %s1696, 8
        %s1698 = scalar_lea.vmem [#allocation2], %s1697
        %v1699 = vld [vmem:[%s1698] sm:$0xff]
        %v1700 = vld [vmem:[%s1698 + $0x8] sm:$0xff]
        %v1701 = vld [vmem:[%s1698 + $0x10] sm:$0xff]
        %v1702 = vld [vmem:[%s1698 + $0x18] sm:$0xff]
        %1703 = vmatprep.subr.mxu0 %v359
        %1704 = vmatpush1.msra.mxu0 %v358
        %1705 = vmatprep.subr.mxu0 %v355
        %1706 = vmatpush1.msra.mxu0 %v354
        %1707 = vmatprep.subr.mxu0 %v351
        %1708 = vmatpush1.msra.mxu0 %v350
        %1709 = vmatprep.subr.mxu0 %v347
        %1710 = vmatpush1.msra.mxu0 %v346
        %1711 = vmatprep.subr.mxu0 %v343
        %1712 = vmatpush1.msra.mxu0 %v342
        %1713 = vmatprep.subr.mxu0 %v339
        %1714 = vmatpush1.msra.mxu0 %v338
        %1715 = vmatprep.subr.mxu0 %v335
        %1716 = vmatpush1.msra.mxu0 %v334
        %1717 = vmatprep.subr.mxu0 %v331
        %1718 = vmatpush1.msra.mxu0 %v330
        %1719 = vmatprep.subr.mxu0 %v327
        %1720 = vmatpush1.msra.mxu0 %v326
        %1721 = vmatprep.subr.mxu0 %v323
        %1722 = vmatpush1.msra.mxu0 %v322
        %1723 = vmatprep.subr.mxu0 %v319
        %1724 = vmatpush1.msra.mxu0 %v318
        %1725 = vmatprep.subr.mxu0 %v315
        %1726 = vmatpush1.msra.mxu0 %v314
        %1727 = vmatprep.subr.mxu0 %v311
        %1728 = vmatpush1.msra.mxu0 %v310
        %1729 = vmatprep.subr.mxu0 %v307
        %1730 = vmatpush1.msra.mxu0 %v306
        %1731 = vmatprep.subr.mxu0 %v303
        %1732 = vmatpush1.msra.mxu0 %v302
        %1733 = vmatprep.subr.mxu0 %v299
        %1734 = vmatpush1.msra.mxu0 %v298
        %1735 = vmatprep.subr.mxu0 0.0
        %1736 = vmatpush2.msra.mxu0 0.0
        %1737 = vmatprep.subr.mxu0 0.0
        %1738 = vmatpush2.msra.mxu0 0.0
        %1739 = vmatprep.subr.mxu0 0.0
        %1740 = vmatpush2.msra.mxu0 0.0
        %1741 = vmatprep.subr.mxu0 0.0
        %1742 = vmatpush2.msra.mxu0 0.0
        %1743 = vmatprep.subr.mxu0 0.0
        %1744 = vmatpush2.msra.mxu0 0.0
        %1745 = vmatprep.subr.mxu0 0.0
        %1746 = vmatpush2.msra.mxu0 0.0
        %1747 = vmatprep.subr.mxu0 0.0
        %1748 = vmatpush2.msra.mxu0 0.0
        %1749 = vmatprep.subr.mxu0 0.0
        %1750 = vmatpush2.msra.mxu0 0.0
        %1751 = vmatprep.subr.mxu0 0.0
        %1752 = vmatpush2.msra.mxu0 0.0
        %1753 = vmatprep.subr.mxu0 0.0
        %1754 = vmatpush2.msra.mxu0 0.0
        %1755 = vmatprep.subr.mxu0 0.0
        %1756 = vmatpush2.msra.mxu0 0.0
        %1757 = vmatprep.subr.mxu0 0.0
        %1758 = vmatpush2.msra.mxu0 0.0
        %1759 = vmatprep.subr.mxu0 0.0
        %1760 = vmatpush2.msra.mxu0 0.0
        %1761 = vmatprep.subr.mxu0 0.0
        %1762 = vmatpush2.msra.mxu0 0.0
        %1763 = vmatprep.subr.mxu0 0.0
        %1764 = vmatpush2.msra.mxu0 0.0
        %1765 = vmatprep.subr.mxu0 0.0
        %1766 = vmatpush2.msra.mxu0 0.0
        %1767 = vmatprep.mubr.f32.mxu0 0.0
        %1768 = vmatmul.mubr.f32.gmra.mxu0 %v1693
        %v1769 = vpop.f32.mrf.mxu0
        %v1770 = vadd.f32 0.0, %v1769
        %v1771 = vpop.f32.mrf.mxu0
        %v1772 = vadd.f32 0.0, %v1771
        %1773 = vdwg.mxu0
        %1774 = vmatprep.subr.mxu0 %v361
        %1775 = vmatpush1.msra.mxu0 %v360
        %1776 = vmatprep.subr.mxu0 %v357
        %1777 = vmatpush1.msra.mxu0 %v356
        %1778 = vmatprep.subr.mxu0 %v353
        %1779 = vmatpush1.msra.mxu0 %v352
        %1780 = vmatprep.subr.mxu0 %v349
        %1781 = vmatpush1.msra.mxu0 %v348
        %1782 = vmatprep.subr.mxu0 %v345
        %1783 = vmatpush1.msra.mxu0 %v344
        %1784 = vmatprep.subr.mxu0 %v341
        %1785 = vmatpush1.msra.mxu0 %v340
        %1786 = vmatprep.subr.mxu0 %v337
        %1787 = vmatpush1.msra.mxu0 %v336
        %1788 = vmatprep.subr.mxu0 %v333
        %1789 = vmatpush1.msra.mxu0 %v332
        %1790 = vmatprep.subr.mxu0 %v329
        %1791 = vmatpush1.msra.mxu0 %v328
        %1792 = vmatprep.subr.mxu0 %v325
        %1793 = vmatpush1.msra.mxu0 %v324
        %1794 = vmatprep.subr.mxu0 %v321
        %1795 = vmatpush1.msra.mxu0 %v320
        %1796 = vmatprep.subr.mxu0 %v317
        %1797 = vmatpush1.msra.mxu0 %v316
        %1798 = vmatprep.subr.mxu0 %v313
        %1799 = vmatpush1.msra.mxu0 %v312
        %1800 = vmatprep.subr.mxu0 %v309
        %1801 = vmatpush1.msra.mxu0 %v308
        %1802 = vmatprep.subr.mxu0 %v305
        %1803 = vmatpush1.msra.mxu0 %v304
        %1804 = vmatprep.subr.mxu0 %v301
        %1805 = vmatpush1.msra.mxu0 %v300
        %1806 = vmatprep.subr.mxu0 0.0
        %1807 = vmatpush2.msra.mxu0 0.0
        %1808 = vmatprep.subr.mxu0 0.0
        %1809 = vmatpush2.msra.mxu0 0.0
        %1810 = vmatprep.subr.mxu0 0.0
        %1811 = vmatpush2.msra.mxu0 0.0
        %1812 = vmatprep.subr.mxu0 0.0
        %1813 = vmatpush2.msra.mxu0 0.0
        %1814 = vmatprep.subr.mxu0 0.0
        %1815 = vmatpush2.msra.mxu0 0.0
        %1816 = vmatprep.subr.mxu0 0.0
        %1817 = vmatpush2.msra.mxu0 0.0
        %1818 = vmatprep.subr.mxu0 0.0
        %1819 = vmatpush2.msra.mxu0 0.0
        %1820 = vmatprep.subr.mxu0 0.0
        %1821 = vmatpush2.msra.mxu0 0.0
        %1822 = vmatprep.subr.mxu0 0.0
        %1823 = vmatpush2.msra.mxu0 0.0
        %1824 = vmatprep.subr.mxu0 0.0
        %1825 = vmatpush2.msra.mxu0 0.0
        %1826 = vmatprep.subr.mxu0 0.0
        %1827 = vmatpush2.msra.mxu0 0.0
        %1828 = vmatprep.subr.mxu0 0.0
        %1829 = vmatpush2.msra.mxu0 0.0
        %1830 = vmatprep.subr.mxu0 0.0
        %1831 = vmatpush2.msra.mxu0 0.0
        %1832 = vmatprep.subr.mxu0 0.0
        %1833 = vmatpush2.msra.mxu0 0.0
        %1834 = vmatprep.subr.mxu0 0.0
        %1835 = vmatpush2.msra.mxu0 0.0
        %1836 = vmatprep.subr.mxu0 0.0
        %1837 = vmatpush2.msra.mxu0 0.0
        %1838 = vmatprep.mubr.f32.mxu0 0.0
        %1839 = vmatmul.mubr.f32.gmra.mxu0 %v1693
        %v1840 = vpop.f32.mrf.mxu0
        %v1841 = vadd.f32 0.0, %v1840
        %v1842 = vpop.f32.mrf.mxu0
        %v1843 = vadd.f32 0.0, %v1842
        %1844 = vdwg.mxu0
        %v1845 = vadd.f32 %v1699, %v1770
        %v1846 = vadd.f32 %v1700, %v1772
        %v1847 = vadd.f32 %v1701, %v1841
        %v1848 = vadd.f32 %v1702, %v1843
        %v1849 = vtanh.pop %v1845
        %v1850 = vtanh.pop %v1846
        %v1851 = vtanh.pop %v1847
        %v1852 = vtanh.pop %v1848
        %v1853 = vmul.f32 %v1849, 0.5
        %v1854 = vadd.f32 %v1853, 0.5
        %v1855 = vmul.f32 %v1850, 0.5
        %v1856 = vadd.f32 %v1855, 0.5
        %v1857 = vmul.f32 %v1852, 0.5
        %v1858 = vadd.f32 %v1857, 0.5
        %v1859 = vmul.f32 %v1856, %v1691
        %v1860 = vmul.f32 %v1854, %v1851
        %v1861 = vadd.f32 %v1859, %v1860
        %v1862 = vtanh.pop %v1861
        %v1863 = vmul.f32 %v1858, %v1862
        %s1864 = scalar_lea.vmem %s273, 48 [#allocation6]
        %1865 = vst [vmem:[%s1864] sm:$0xff] %v1863
        %s1866 = smul.u32 7, 4
        %s1867 = smul.addr %s1866, 8
        %s1868 = scalar_lea.vmem [#allocation2], %s1867
        %v1869 = vld [vmem:[%s1868] sm:$0xff]
        %v1870 = vld [vmem:[%s1868 + $0x8] sm:$0xff]
        %v1871 = vld [vmem:[%s1868 + $0x10] sm:$0xff]
        %v1872 = vld [vmem:[%s1868 + $0x18] sm:$0xff]
        %1873 = vmatprep.subr.mxu0 %v359
        %1874 = vmatpush1.msra.mxu0 %v358
        %1875 = vmatprep.subr.mxu0 %v355
        %1876 = vmatpush1.msra.mxu0 %v354
        %1877 = vmatprep.subr.mxu0 %v351
        %1878 = vmatpush1.msra.mxu0 %v350
        %1879 = vmatprep.subr.mxu0 %v347
        %1880 = vmatpush1.msra.mxu0 %v346
        %1881 = vmatprep.subr.mxu0 %v343
        %1882 = vmatpush1.msra.mxu0 %v342
        %1883 = vmatprep.subr.mxu0 %v339
        %1884 = vmatpush1.msra.mxu0 %v338
        %1885 = vmatprep.subr.mxu0 %v335
        %1886 = vmatpush1.msra.mxu0 %v334
        %1887 = vmatprep.subr.mxu0 %v331
        %1888 = vmatpush1.msra.mxu0 %v330
        %1889 = vmatprep.subr.mxu0 %v327
        %1890 = vmatpush1.msra.mxu0 %v326
        %1891 = vmatprep.subr.mxu0 %v323
        %1892 = vmatpush1.msra.mxu0 %v322
        %1893 = vmatprep.subr.mxu0 %v319
        %1894 = vmatpush1.msra.mxu0 %v318
        %1895 = vmatprep.subr.mxu0 %v315
        %1896 = vmatpush1.msra.mxu0 %v314
        %1897 = vmatprep.subr.mxu0 %v311
        %1898 = vmatpush1.msra.mxu0 %v310
        %1899 = vmatprep.subr.mxu0 %v307
        %1900 = vmatpush1.msra.mxu0 %v306
        %1901 = vmatprep.subr.mxu0 %v303
        %1902 = vmatpush1.msra.mxu0 %v302
        %1903 = vmatprep.subr.mxu0 %v299
        %1904 = vmatpush1.msra.mxu0 %v298
        %1905 = vmatprep.subr.mxu0 0.0
        %1906 = vmatpush2.msra.mxu0 0.0
        %1907 = vmatprep.subr.mxu0 0.0
        %1908 = vmatpush2.msra.mxu0 0.0
        %1909 = vmatprep.subr.mxu0 0.0
        %1910 = vmatpush2.msra.mxu0 0.0
        %1911 = vmatprep.subr.mxu0 0.0
        %1912 = vmatpush2.msra.mxu0 0.0
        %1913 = vmatprep.subr.mxu0 0.0
        %1914 = vmatpush2.msra.mxu0 0.0
        %1915 = vmatprep.subr.mxu0 0.0
        %1916 = vmatpush2.msra.mxu0 0.0
        %1917 = vmatprep.subr.mxu0 0.0
        %1918 = vmatpush2.msra.mxu0 0.0
        %1919 = vmatprep.subr.mxu0 0.0
        %1920 = vmatpush2.msra.mxu0 0.0
        %1921 = vmatprep.subr.mxu0 0.0
        %1922 = vmatpush2.msra.mxu0 0.0
        %1923 = vmatprep.subr.mxu0 0.0
        %1924 = vmatpush2.msra.mxu0 0.0
        %1925 = vmatprep.subr.mxu0 0.0
        %1926 = vmatpush2.msra.mxu0 0.0
        %1927 = vmatprep.subr.mxu0 0.0
        %1928 = vmatpush2.msra.mxu0 0.0
        %1929 = vmatprep.subr.mxu0 0.0
        %1930 = vmatpush2.msra.mxu0 0.0
        %1931 = vmatprep.subr.mxu0 0.0
        %1932 = vmatpush2.msra.mxu0 0.0
        %1933 = vmatprep.subr.mxu0 0.0
        %1934 = vmatpush2.msra.mxu0 0.0
        %1935 = vmatprep.subr.mxu0 0.0
        %1936 = vmatpush2.msra.mxu0 0.0
        %1937 = vmatprep.mubr.f32.mxu0 0.0
        %1938 = vmatmul.mubr.f32.gmra.mxu0 %v1863
        %v1939 = vpop.f32.mrf.mxu0
        %v1940 = vadd.f32 0.0, %v1939
        %v1941 = vpop.f32.mrf.mxu0
        %v1942 = vadd.f32 0.0, %v1941
        %1943 = vdwg.mxu0
        %1944 = vmatprep.subr.mxu0 %v361
        %1945 = vmatpush1.msra.mxu0 %v360
        %1946 = vmatprep.subr.mxu0 %v357
        %1947 = vmatpush1.msra.mxu0 %v356
        %1948 = vmatprep.subr.mxu0 %v353
        %1949 = vmatpush1.msra.mxu0 %v352
        %1950 = vmatprep.subr.mxu0 %v349
        %1951 = vmatpush1.msra.mxu0 %v348
        %1952 = vmatprep.subr.mxu0 %v345
        %1953 = vmatpush1.msra.mxu0 %v344
        %1954 = vmatprep.subr.mxu0 %v341
        %1955 = vmatpush1.msra.mxu0 %v340
        %1956 = vmatprep.subr.mxu0 %v337
        %1957 = vmatpush1.msra.mxu0 %v336
        %1958 = vmatprep.subr.mxu0 %v333
        %1959 = vmatpush1.msra.mxu0 %v332
        %1960 = vmatprep.subr.mxu0 %v329
        %1961 = vmatpush1.msra.mxu0 %v328
        %1962 = vmatprep.subr.mxu0 %v325
        %1963 = vmatpush1.msra.mxu0 %v324
        %1964 = vmatprep.subr.mxu0 %v321
        %1965 = vmatpush1.msra.mxu0 %v320
        %1966 = vmatprep.subr.mxu0 %v317
        %1967 = vmatpush1.msra.mxu0 %v316
        %1968 = vmatprep.subr.mxu0 %v313
        %1969 = vmatpush1.msra.mxu0 %v312
        %1970 = vmatprep.subr.mxu0 %v309
        %1971 = vmatpush1.msra.mxu0 %v308
        %1972 = vmatprep.subr.mxu0 %v305
        %1973 = vmatpush1.msra.mxu0 %v304
        %1974 = vmatprep.subr.mxu0 %v301
        %1975 = vmatpush1.msra.mxu0 %v300
        %1976 = vmatprep.subr.mxu0 0.0
        %1977 = vmatpush2.msra.mxu0 0.0
        %1978 = vmatprep.subr.mxu0 0.0
        %1979 = vmatpush2.msra.mxu0 0.0
        %1980 = vmatprep.subr.mxu0 0.0
        %1981 = vmatpush2.msra.mxu0 0.0
        %1982 = vmatprep.subr.mxu0 0.0
        %1983 = vmatpush2.msra.mxu0 0.0
        %1984 = vmatprep.subr.mxu0 0.0
        %1985 = vmatpush2.msra.mxu0 0.0
        %1986 = vmatprep.subr.mxu0 0.0
        %1987 = vmatpush2.msra.mxu0 0.0
        %1988 = vmatprep.subr.mxu0 0.0
        %1989 = vmatpush2.msra.mxu0 0.0
        %1990 = vmatprep.subr.mxu0 0.0
        %1991 = vmatpush2.msra.mxu0 0.0
        %1992 = vmatprep.subr.mxu0 0.0
        %1993 = vmatpush2.msra.mxu0 0.0
        %1994 = vmatprep.subr.mxu0 0.0
        %1995 = vmatpush2.msra.mxu0 0.0
        %1996 = vmatprep.subr.mxu0 0.0
        %1997 = vmatpush2.msra.mxu0 0.0
        %1998 = vmatprep.subr.mxu0 0.0
        %1999 = vmatpush2.msra.mxu0 0.0
        %2000 = vmatprep.subr.mxu0 0.0
        %2001 = vmatpush2.msra.mxu0 0.0
        %2002 = vmatprep.subr.mxu0 0.0
        %2003 = vmatpush2.msra.mxu0 0.0
        %2004 = vmatprep.subr.mxu0 0.0
        %2005 = vmatpush2.msra.mxu0 0.0
        %2006 = vmatprep.subr.mxu0 0.0
        %2007 = vmatpush2.msra.mxu0 0.0
        %2008 = vmatprep.mubr.f32.mxu0 0.0
        %2009 = vmatmul.mubr.f32.gmra.mxu0 %v1863
        %v2010 = vpop.f32.mrf.mxu0
        %v2011 = vadd.f32 0.0, %v2010
        %v2012 = vpop.f32.mrf.mxu0
        %v2013 = vadd.f32 0.0, %v2012
        %2014 = vdwg.mxu0
        %v2015 = vadd.f32 %v1869, %v1940
        %v2016 = vadd.f32 %v1870, %v1942
        %v2017 = vadd.f32 %v1871, %v2011
        %v2018 = vadd.f32 %v1872, %v2013
        %v2019 = vtanh.pop %v2015
        %v2020 = vtanh.pop %v2016
        %v2021 = vtanh.pop %v2017
        %v2022 = vtanh.pop %v2018
        %v2023 = vmul.f32 %v2019, 0.5
        %v2024 = vadd.f32 %v2023, 0.5
        %v2025 = vmul.f32 %v2020, 0.5
        %v2026 = vadd.f32 %v2025, 0.5
        %v2027 = vmul.f32 %v2022, 0.5
        %v2028 = vadd.f32 %v2027, 0.5
        %v2029 = vmul.f32 %v2026, %v1861
        %v2030 = vmul.f32 %v2024, %v2021
        %v2031 = vadd.f32 %v2029, %v2030
        %v2032 = vtanh.pop %v2031
        %v2033 = vmul.f32 %v2028, %v2032
        %s2034 = scalar_lea.vmem %s273, 56 [#allocation6]
        %2035 = vst [vmem:[%s2034] sm:$0xff] %v2033
        %2036 = vst [vmem:[#allocation3] sm:$0xff] %v2033
        %2037 = vst [vmem:[#allocation4] sm:$0xff] %v2031
        %s2038 = sand.u32 %s128, 1
        %s2039 = sand.u32 %s128, 1
        %s2040 = smul.addr %s2039, 64
        %s2041 = scalar_lea.vmem [#allocation6], %s2040
        // Predicated region
        $region79: #{baseline_tagger_forward.1} parent=69 // pred_check
          %p2042 = pneg %p138
        $region80: #{baseline_tagger_forward.1} parent=69 // pred_check_branch
          %2044 = sbr.rel (%p2042) target = $region82
        $region81: #{baseline_tagger_forward.1} parent=69 // pred_region
          %s2045 = smul.u32 8, %s20
          %s2046 = smul.addr %s2045, 2
          %s2047 = sadd.s32 %s19, %s2046
          %s2048 = smul.addr %s2047, 8
          %s2049 = scalar_lea.vmem %s4, %s2048
          // Predicated region
          $region83: #{baseline_tagger_forward.1} parent=81 // pred_check
            _
          $region84: #{baseline_tagger_forward.1} parent=81 // pred_check_branch
            %2051 = sbr.rel (0) target = $region86
          $region85: #{baseline_tagger_forward.1} parent=81 // pred_region
            // Predicated region
            $region87: #{baseline_tagger_forward.1} parent=85 // pred_check
              _
            $region88: #{baseline_tagger_forward.1} parent=85 // pred_check_branch
              %2053 = sbr.rel (0) target = $region90
            $region89: #{baseline_tagger_forward.1} parent=85 // pred_region
              // Predicated region
              $region102: #{baseline_tagger_forward.1} parent=89 // pred_check
                _
              $region103: #{baseline_tagger_forward.1} parent=89 // pred_check_branch
                %2083 = sbr.rel (0) target = $region105
              $region104: #{baseline_tagger_forward.1} parent=89 // pred_region
                loop: start=0, step=1, limit=1
                $region106: #{baseline_tagger_forward.1} parent=104 // loop_pre_header
                  _
                $region107: #{baseline_tagger_forward.1} parent=104 // loop_header
                  %s2085 = sphi 0, %s2089
                  %p2086 = scmp.ge.s32.totalorder %s2085, 1
                  %s2090 = sphi %s2041, %s2041
                  %s2091 = sphi %s2049, %s2049
                $region108: #{baseline_tagger_forward.1} parent=104 // loop_header_branch
                  %2088 = sbr.rel (%p2086) target = $region112
                $region109: #{baseline_tagger_forward.1} parent=104 // loop_body
                  %v2092 = vld [vmem:[%s2090] sm:$0xff]
                  %2093 = vst [vmem:[%s2091] sm:$0xff] %v2092
                  %v2094 = vld [vmem:[%s2090 + $0x8] sm:$0xff]
                  %2095 = vst [vmem:[%s2091 + $0x10] sm:$0xff] %v2094
                  %v2096 = vld [vmem:[%s2090 + $0x10] sm:$0xff]
                  %2097 = vst [vmem:[%s2091 + $0x20] sm:$0xff] %v2096
                  %v2098 = vld [vmem:[%s2090 + $0x18] sm:$0xff]
                  %2099 = vst [vmem:[%s2091 + $0x30] sm:$0xff] %v2098
                  %v2100 = vld [vmem:[%s2090 + $0x20] sm:$0xff]
                  %2101 = vst [vmem:[%s2091 + $0x40] sm:$0xff] %v2100
                  %v2102 = vld [vmem:[%s2090 + $0x28] sm:$0xff]
                  %2103 = vst [vmem:[%s2091 + $0x50] sm:$0xff] %v2102
                  %v2104 = vld [vmem:[%s2090 + $0x30] sm:$0xff]
                  %2105 = vst [vmem:[%s2091 + $0x60] sm:$0xff] %v2104
                  %v2106 = vld [vmem:[%s2090 + $0x38] sm:$0xff]
                  %2107 = vst [vmem:[%s2091 + $0x70] sm:$0xff] %v2106
                $region110: #{baseline_tagger_forward.1} parent=104 // loop_footer
                  %s2089 = sadd.s32 1, %s2085
                $region111: #{baseline_tagger_forward.1} parent=104 // loop_footer_branch
                  %2084 = sbr.rel target = $region107
                $region112: #{baseline_tagger_forward.1} parent=104 // loop_exit
                  _
              $region105: #{baseline_tagger_forward.1} parent=89 // pred_fallthru
                _
              // Predicated region
              $region113: #{baseline_tagger_forward.1} parent=89 // pred_check
                _
              $region114: #{baseline_tagger_forward.1} parent=89 // pred_check_branch
                %2109 = sbr.rel target = $region116
              $region115: #{baseline_tagger_forward.1} parent=89 // pred_region
                _
              $region116: #{baseline_tagger_forward.1} parent=89 // pred_fallthru
                _
            $region90: #{baseline_tagger_forward.1} parent=85 // pred_fallthru
              _
            // Predicated region
            $region91: #{baseline_tagger_forward.1} parent=85 // pred_check
              _
            $region92: #{baseline_tagger_forward.1} parent=85 // pred_check_branch
              %2055 = sbr.rel target = $region94
            $region93: #{baseline_tagger_forward.1} parent=85 // pred_region
              %s2057 = ssub.s32 256, 1
              loop: start=0, step=1, limit=1
              $region95: #{baseline_tagger_forward.1} parent=93 // loop_pre_header
                _
              $region96: #{baseline_tagger_forward.1} parent=93 // loop_header
                %s2059 = sphi 0, %s2063
                %p2060 = scmp.ge.s32.totalorder %s2059, 1
                %s2064 = sphi %s2041, %s2041
                %s2065 = sphi %s2049, %s2049
              $region97: #{baseline_tagger_forward.1} parent=93 // loop_header_branch
                %2062 = sbr.rel (%p2060) target = $region101
              $region98: #{baseline_tagger_forward.1} parent=93 // loop_body
                %v2066 = vld [vmem:[%s2064] sm:%s2057]
                %2067 = vst [vmem:[%s2065] sm:%s2057] %v2066
                %v2068 = vld [vmem:[%s2064 + $0x8] sm:%s2057]
                %2069 = vst [vmem:[%s2065 + $0x10] sm:%s2057] %v2068
                %v2070 = vld [vmem:[%s2064 + $0x10] sm:%s2057]
                %2071 = vst [vmem:[%s2065 + $0x20] sm:%s2057] %v2070
                %v2072 = vld [vmem:[%s2064 + $0x18] sm:%s2057]
                %2073 = vst [vmem:[%s2065 + $0x30] sm:%s2057] %v2072
                %v2074 = vld [vmem:[%s2064 + $0x20] sm:%s2057]
                %2075 = vst [vmem:[%s2065 + $0x40] sm:%s2057] %v2074
                %v2076 = vld [vmem:[%s2064 + $0x28] sm:%s2057]
                %2077 = vst [vmem:[%s2065 + $0x50] sm:%s2057] %v2076
                %v2078 = vld [vmem:[%s2064 + $0x30] sm:%s2057]
                %2079 = vst [vmem:[%s2065 + $0x60] sm:%s2057] %v2078
                %v2080 = vld [vmem:[%s2064 + $0x38] sm:%s2057]
                %2081 = vst [vmem:[%s2065 + $0x70] sm:%s2057] %v2080
              $region99: #{baseline_tagger_forward.1} parent=93 // loop_footer
                %s2063 = sadd.s32 1, %s2059
              $region100: #{baseline_tagger_forward.1} parent=93 // loop_footer_branch
                %2058 = sbr.rel target = $region96
              $region101: #{baseline_tagger_forward.1} parent=93 // loop_exit
                _
            $region94: #{baseline_tagger_forward.1} parent=85 // pred_fallthru
              _
          $region86: #{baseline_tagger_forward.1} parent=81 // pred_fallthru
            _
          %2110 = vnop
        $region82: #{baseline_tagger_forward.1} parent=69 // pred_fallthru
          _
      $region70: #{baseline_tagger_forward.1} parent=5 // pred_fallthru
        _
      %p2111 = scmp.le.s32.totalorder 2, %s10
      // Predicated region
      $region117: #{baseline_tagger_forward.1} parent=5 // pred_check
        %p2112 = pneg %p2111
      $region118: #{baseline_tagger_forward.1} parent=5 // pred_check_branch
        %2114 = sbr.rel (%p2112) target = $region120
      $region119: #{baseline_tagger_forward.1} parent=5 // pred_region
        %s2115 = ssub.s32 %s10, 2
        // Predicated region
        $region121: #{baseline_tagger_forward.1} parent=119 // pred_check
          %p2116 = pneg %p144
        $region122: #{baseline_tagger_forward.1} parent=119 // pred_check_branch
          %2118 = sbr.rel (%p2116) target = $region124
        $region123: #{baseline_tagger_forward.1} parent=119 // pred_region
          %s2119 = sand.u32 %s129, 1
          %s2120 = sand.u32 %s129, 1
          %s2121 = smul.addr %s2120, 64
          %s2122 = scalar_lea.vmem [#allocation6], %s2121
        $region124: #{baseline_tagger_forward.1} parent=119 // pred_fallthru
          _
      $region120: #{baseline_tagger_forward.1} parent=5 // pred_fallthru
        _
    $region6: #{baseline_tagger_forward.1} parent=1 // loop_footer
      %s14 = sadd.s32 1, %s10
    $region7: #{baseline_tagger_forward.1} parent=1 // loop_footer_branch
      %9 = sbr.rel target = $region3
    $region8: #{baseline_tagger_forward.1} parent=1 // loop_exit
      _

</llo_original>
